<compile_context>
chip_gen: v6e
topology: v6e:2x2x1
jax: 0.10.0
libtpu: 0.0.40
codegen_flags: <defaults>
</compile_context>

<pallas_src>
import functools
import math

import jax
import jax.numpy as jnp
from jax import lax
from jax.experimental import pallas as pl
from jax.experimental.pallas import tpu as pltpu


def _round_up(x, m):
    return (x + m - 1) // m * m


def _flash_attn_kernel(q_ref, k_ref, v_ref, o_ref,
                       qh_ref, acc_ref, m_ref, l_ref, *,
                       heads, head_dim, scale, mxu_dtype,
                       kv_len, kv_tile, mask_kv_tail):
    """One grid step: all heads, one (q-tile, kv-tile) pair of one batch row."""
    ki = pl.program_id(2)
    nk = pl.num_programs(2)

    # ---- init: once per (batch, q-tile). Hoist the per-head Q slicing and the
    # 1/sqrt(D) scale out of the kv loop into head-major scratch in MXU dtype.
    @pl.when(ki == 0)
    def _init():
        for h in range(heads):
            lo = h * head_dim
            q_h = q_ref[0, :, lo:lo + head_dim].astype(jnp.float32) * scale
            qh_ref[h] = q_h.astype(mxu_dtype)
        acc_ref[...] = jnp.zeros_like(acc_ref)
        m_ref[...] = jnp.full_like(m_ref, -jnp.inf)
        l_ref[...] = jnp.zeros_like(l_ref)

    if mask_kv_tail:
        # Number of valid keys in this kv tile (>= 1 by construction); only the
        # last tile can be partially padded.
        valid = kv_len - ki * kv_tile
        col = lax.broadcasted_iota(jnp.int32, (1, kv_tile), 1)
        key_mask = col < valid

    # Static head loop; head-major scratch keeps every per-head accumulator
    # update a full-view, lane-aligned store.
    for h in range(heads):
        lo = h * head_dim
        q_h = qh_ref[h]                                         # (tq, D), pre-scaled, MXU dtype
        k_h = k_ref[0, :, lo:lo + head_dim].astype(mxu_dtype)   # (tk, D)
        v_h = v_ref[0, :, lo:lo + head_dim]                     # (tk, D)

        # scores (tq, tk): contract over head_dim (no explicit transpose),
        # f32 accumulation on the MXU.
        s = lax.dot_general(q_h, k_h, (((1,), (1,)), ((), ())),
                            preferred_element_type=jnp.float32)
        if mask_kv_tail:
            s = jnp.where(key_mask, s, -jnp.inf)

        m_prev = m_ref[h]                                       # (tq, 1) running max
        l_prev = l_ref[h]                                       # (tq, 1) running sum
        m_new = jnp.maximum(m_prev, jnp.max(s, axis=-1, keepdims=True))
        alpha = jnp.exp(m_prev - m_new)
        p = jnp.exp(s - m_new)
        l_ref[h] = alpha * l_prev + jnp.sum(p, axis=-1, keepdims=True)
        m_ref[h] = m_new

        pv = jnp.dot(p.astype(mxu_dtype), v_h.astype(mxu_dtype),
                     preferred_element_type=jnp.float32)        # (tq, D)
        acc_ref[h] = alpha * acc_ref[h] + pv                    # full-view, aligned RMW

    # ---- finalize: exact normalization (cheap: only (tq, 1) per head), then a
    # single lane-dense (tq, C) store of all heads.
    @pl.when(ki == nk - 1)
    def _finalize():
        outs = []
        for h in range(heads):
            outs.append((acc_ref[h] / l_ref[h]).astype(o_ref.dtype))
        o_ref[0] = jnp.concatenate(outs, axis=-1)


def _tile_footprint_bytes(shape, dtype):
    """Conservative VMEM footprint of a tile (last two dims padded to (8, 128))."""
    s = list(shape)
    s[-1] = _round_up(s[-1], 128)
    if len(s) >= 2:
        s[-2] = _round_up(s[-2], 8)
    n = 1
    for d in s:
        n *= int(d)
    return n * jnp.dtype(dtype).itemsize


def attention_pallas(Q, K, V, attn_heads, *, q_tile=256, kv_tile=512,
                     use_bf16_mxu=True, vmem_limit_bytes=None):
    """Q: (B, Tq, C), K/V: (B, Tk, C) -> (B, Tq, C). Mirrors the torch module."""
    B, Tk, C = K.shape
    Tq = Q.shape[1]
    H = attn_heads
    D = C // H
    assert H * D == C, "channels must be divisible by attn_heads"
    scale = 1.0 / math.sqrt(D)  # matches F.scaled_dot_product_attention default

    # MXU operand dtype: bf16 for f32 inputs (f32 accumulation), pass-through otherwise.
    mxu_dtype = jnp.bfloat16 if (use_bf16_mxu and Q.dtype == jnp.float32) else Q.dtype

    # Tile sizes: keep the (8, 128)-friendly constraint on the sublane dim and
    # pad/mask awkward sequence lengths instead of degrading to tiny tiles.
    tq = min(q_tile, _round_up(Tq, 8))
    tk = min(kv_tile, _round_up(Tk, 8))
    Tq_p = _round_up(Tq, tq)
    Tk_p = _round_up(Tk, tk)
    nq = Tq_p // tq
    nk = Tk_p // tk
    mask_kv_tail = Tk_p != Tk

    Qp = Q if Tq_p == Tq else jnp.pad(Q, ((0, 0), (0, Tq_p - Tq), (0, 0)))
    Kp = K if Tk_p == Tk else jnp.pad(K, ((0, 0), (0, Tk_p - Tk), (0, 0)))
    Vp = V if Tk_p == Tk else jnp.pad(V, ((0, 0), (0, Tk_p - Tk), (0, 0)))

    kernel = functools.partial(
        _flash_attn_kernel, heads=H, head_dim=D, scale=scale,
        mxu_dtype=mxu_dtype, kv_len=Tk, kv_tile=tk, mask_kv_tail=mask_kv_tail)

    # VMEM budget from the actual footprint (double-buffered blocks + scratch),
    # with headroom; stays well below v7x's 64 MiB/TC for the default tiles.
    if vmem_limit_bytes is None:
        in_dt = Q.dtype
        blocks = (_tile_footprint_bytes((tq, C), in_dt)          # Q block
                  + 2 * _tile_footprint_bytes((tk, C), in_dt)    # K, V blocks
                  + _tile_footprint_bytes((tq, C), in_dt))       # O block
        scratch = (_tile_footprint_bytes((H, tq, D), mxu_dtype)
                   + _tile_footprint_bytes((H, tq, D), jnp.float32)
                   + 2 * _tile_footprint_bytes((H, tq, 1), jnp.float32))
        needed = 2 * blocks + scratch
        vmem_limit_bytes = int(min(max(2 * needed, 32 << 20), 112 << 20))

    itemsize = jnp.dtype(Q.dtype).itemsize
    cost = pl.CostEstimate(
        flops=int(4 * B * H * Tq * Tk * D),
        transcendentals=int(B * H * Tq * Tk),
        # K/V are re-streamed once per q tile.
        bytes_accessed=int(itemsize * (Q.size + nq * (K.size + V.size) + B * Tq * C)),
    )

    out = pl.pallas_call(
        kernel,
        out_shape=jax.ShapeDtypeStruct((B, Tq_p, C), Q.dtype),
        grid_spec=pltpu.PrefetchScalarGridSpec(
            num_scalar_prefetch=0,
            grid=(B, nq, nk),
            in_specs=[
                pl.BlockSpec((1, tq, C), lambda b, qi, ki: (b, qi, 0)),
                pl.BlockSpec((1, tk, C), lambda b, qi, ki: (b, ki, 0)),
                pl.BlockSpec((1, tk, C), lambda b, qi, ki: (b, ki, 0)),
            ],
            out_specs=pl.BlockSpec((1, tq, C), lambda b, qi, ki: (b, qi, 0)),
            scratch_shapes=[
                pltpu.VMEM((H, tq, D), mxu_dtype),     # pre-scaled Q, head-major
                pltpu.VMEM((H, tq, D), jnp.float32),   # f32 output accumulator, head-major
                pltpu.VMEM((H, tq, 1), jnp.float32),   # running max, per head
                pltpu.VMEM((H, tq, 1), jnp.float32),   # running sum, per head
            ],
        ),
        compiler_params=pltpu.CompilerParams(
            dimension_semantics=("parallel", "parallel", "arbitrary"),
            vmem_limit_bytes=vmem_limit_bytes,
        ),
        cost_estimate=cost,
    )(Qp, Kp, Vp)

    if Tq_p != Tq:
        out = out[:, :Tq]
    return out


def attention_ref(Q, K, V, attn_heads):
    """Pure-JAX reference matching the torch module semantics (f32 math)."""
    B, Tk, C = K.shape
    Tq = Q.shape[1]
    H = attn_heads
    D = C // H
    q = Q.reshape(B, Tq, H, D).transpose(0, 2, 1, 3).astype(jnp.float32)
    k = K.reshape(B, Tk, H, D).transpose(0, 2, 1, 3).astype(jnp.float32)
    v = V.reshape(B, Tk, H, D).transpose(0, 2, 1, 3).astype(jnp.float32)
    s = jnp.einsum("bhqd,bhkd->bhqk", q, k) / math.sqrt(D)
    p = jax.nn.softmax(s, axis=-1)
    o = jnp.einsum("bhqk,bhkd->bhqd", p, v)
    return o.transpose(0, 2, 1, 3).reshape(B, Tq, C).astype(Q.dtype)


if __name__ == "__main__":
    # Small shapes consistent with the module's forward:
    #   B=2, Tq=8, Tk=8, C=32, attn_heads=4 -> head_dim=8
    B, Tq, Tk, C = 2, 8, 8, 32
    attn_heads = 4

    key = jax.random.PRNGKey(0)
    kq, kk, kv = jax.random.split(key, 3)
    Q = jax.random.normal(kq, (B, Tq, C), dtype=jnp.float32)
    K = jax.random.normal(kk, (B, Tk, C), dtype=jnp.float32)
    V = jax.random.normal(kv, (B, Tk, C), dtype=jnp.float32)

    ref = attention_ref(Q, K, V, attn_heads)

    # Full-precision path: exact reciprocal + f32 MXU -> must match tightly.
    out_exact = jax.block_until_ready(
        attention_pallas(Q, K, V, attn_heads, use_bf16_mxu=False))
    assert out_exact.shape == (B, Tq, C), out_exact.shape
    err_exact = float(jnp.max(jnp.abs(out_exact - ref)))
    assert err_exact < 2e-3, f"f32 path mismatch vs reference: {err_exact}"

    # Default fast path: bf16 operands to the MXU, f32 accumulation. The only
    # deviation is bf16 quantization of the QK^T / PV operands (exp amplifies
    # the ~2^-9 relative score error), so the bound is looser but still tight
    # relative to the O(1) output scale.
    out_fast = jax.block_until_ready(attention_pallas(Q, K, V, attn_heads))
    assert out_fast.shape == (B, Tq, C), out_fast.shape
    err_fast = float(jnp.max(jnp.abs(out_fast - ref)))
    assert err_fast < 1e-1, f"bf16-MXU path mismatch vs reference: {err_fast}"

    print("KERNEL_OK")
</pallas_src>

<mosaic_0001>
module attributes {stable_mosaic.version = 11 : i64} {
  func.func @_flash_attn_kernel(%arg0: i32, %arg1: i32, %arg2: i32, %arg3: memref<1x8x32xf32, #tpu.memory_space<vmem>>, %arg4: memref<1x8x32xf32, #tpu.memory_space<vmem>>, %arg5: memref<1x8x32xf32, #tpu.memory_space<vmem>>, %arg6: memref<1x8x32xf32, #tpu.memory_space<vmem>>, %arg7: memref<4x8x8xf32, #tpu.memory_space<vmem>>, %arg8: memref<4x8x8xf32, #tpu.memory_space<vmem>>, %arg9: memref<4x8x1xf32, #tpu.memory_space<vmem>>, %arg10: memref<4x8x1xf32, #tpu.memory_space<vmem>>) attributes {dimension_semantics = [#tpu.dimension_semantics<parallel>, #tpu.dimension_semantics<parallel>, #tpu.dimension_semantics<arbitrary>], iteration_bounds = array<i64: 2, 1, 1>, scalar_prefetch = 0 : i64, scratch_operands = 4 : i64, tpu.core_type = #tpu.core_type<tc>, window_params = [{transform_indices = @transform_0, window_bounds = array<i64: 1, 8, 32>}, {transform_indices = @transform_1, window_bounds = array<i64: 1, 8, 32>}, {transform_indices = @transform_2, window_bounds = array<i64: 1, 8, 32>}, {transform_indices = @transform_3, window_bounds = array<i64: 1, 8, 32>}]} {
    %c0_i32 = arith.constant 0 : i32
    %0 = arith.cmpi eq, %arg2, %c0_i32 : i32
    %1 = arith.extui %0 : i1 to i32
    %c0_i32_0 = arith.constant 0 : i32
    %2 = arith.cmpi ne, %1, %c0_i32_0 : i32
    scf.if %2 {
      %c0_119 = arith.constant 0 : index
      %c0_120 = arith.constant 0 : index
      %c0_121 = arith.constant 0 : index
      %158 = vector.load %arg3[%c0_119, %c0_120, %c0_121] : memref<1x8x32xf32, #tpu.memory_space<vmem>>, vector<1x8x8xf32>
      %159 = vector.shape_cast %158 : vector<1x8x8xf32> to vector<8x8xf32>
      %cst_122 = arith.constant 0.353553385 : f32
      %160 = vector.broadcast %cst_122 : f32 to vector<8x8xf32>
      %161 = arith.mulf %159, %160 : vector<8x8xf32>
      %c0_123 = arith.constant 0 : index
      %c0_124 = arith.constant 0 : index
      %c0_125 = arith.constant 0 : index
      %162 = vector.load %arg7[%c0_123, %c0_124, %c0_125] : memref<4x8x8xf32, #tpu.memory_space<vmem>>, vector<1x8x8xf32>
      %163 = vector.shape_cast %162 : vector<1x8x8xf32> to vector<8x8xf32>
      %164 = vector.shape_cast %161 : vector<8x8xf32> to vector<1x8x8xf32>
      tpu.vector_store %arg7[%c0_123, %c0_124, %c0_125], %164 {strides = array<i32>} : memref<4x8x8xf32, #tpu.memory_space<vmem>>, vector<1x8x8xf32>,
      %c0_126 = arith.constant 0 : index
      %c0_127 = arith.constant 0 : index
      %c8_128 = arith.constant 8 : index
      %165 = vector.load %arg3[%c0_126, %c0_127, %c8_128] : memref<1x8x32xf32, #tpu.memory_space<vmem>>, vector<1x8x8xf32>
      %166 = vector.shape_cast %165 : vector<1x8x8xf32> to vector<8x8xf32>
      %cst_129 = arith.constant 0.353553385 : f32
      %167 = vector.broadcast %cst_129 : f32 to vector<8x8xf32>
      %168 = arith.mulf %166, %167 : vector<8x8xf32>
      %c1_130 = arith.constant 1 : index
      %c0_131 = arith.constant 0 : index
      %c0_132 = arith.constant 0 : index
      %169 = vector.load %arg7[%c1_130, %c0_131, %c0_132] : memref<4x8x8xf32, #tpu.memory_space<vmem>>, vector<1x8x8xf32>
      %170 = vector.shape_cast %169 : vector<1x8x8xf32> to vector<8x8xf32>
      %171 = vector.shape_cast %168 : vector<8x8xf32> to vector<1x8x8xf32>
      tpu.vector_store %arg7[%c1_130, %c0_131, %c0_132], %171 {strides = array<i32>} : memref<4x8x8xf32, #tpu.memory_space<vmem>>, vector<1x8x8xf32>,
      %c0_133 = arith.constant 0 : index
      %c0_134 = arith.constant 0 : index
      %c16_135 = arith.constant 16 : index
      %172 = vector.load %arg3[%c0_133, %c0_134, %c16_135] : memref<1x8x32xf32, #tpu.memory_space<vmem>>, vector<1x8x8xf32>
      %173 = vector.shape_cast %172 : vector<1x8x8xf32> to vector<8x8xf32>
      %cst_136 = arith.constant 0.353553385 : f32
      %174 = vector.broadcast %cst_136 : f32 to vector<8x8xf32>
      %175 = arith.mulf %173, %174 : vector<8x8xf32>
      %c2_137 = arith.constant 2 : index
      %c0_138 = arith.constant 0 : index
      %c0_139 = arith.constant 0 : index
      %176 = vector.load %arg7[%c2_137, %c0_138, %c0_139] : memref<4x8x8xf32, #tpu.memory_space<vmem>>, vector<1x8x8xf32>
      %177 = vector.shape_cast %176 : vector<1x8x8xf32> to vector<8x8xf32>
      %178 = vector.shape_cast %175 : vector<8x8xf32> to vector<1x8x8xf32>
      tpu.vector_store %arg7[%c2_137, %c0_138, %c0_139], %178 {strides = array<i32>} : memref<4x8x8xf32, #tpu.memory_space<vmem>>, vector<1x8x8xf32>,
      %c0_140 = arith.constant 0 : index
      %c0_141 = arith.constant 0 : index
      %c24_142 = arith.constant 24 : index
      %179 = vector.load %arg3[%c0_140, %c0_141, %c24_142] : memref<1x8x32xf32, #tpu.memory_space<vmem>>, vector<1x8x8xf32>
      %180 = vector.shape_cast %179 : vector<1x8x8xf32> to vector<8x8xf32>
      %cst_143 = arith.constant 0.353553385 : f32
      %181 = vector.broadcast %cst_143 : f32 to vector<8x8xf32>
      %182 = arith.mulf %180, %181 : vector<8x8xf32>
      %c3_144 = arith.constant 3 : index
      %c0_145 = arith.constant 0 : index
      %c0_146 = arith.constant 0 : index
      %183 = vector.load %arg7[%c3_144, %c0_145, %c0_146] : memref<4x8x8xf32, #tpu.memory_space<vmem>>, vector<1x8x8xf32>
      %184 = vector.shape_cast %183 : vector<1x8x8xf32> to vector<8x8xf32>
      %185 = vector.shape_cast %182 : vector<8x8xf32> to vector<1x8x8xf32>
      tpu.vector_store %arg7[%c3_144, %c0_145, %c0_146], %185 {strides = array<i32>} : memref<4x8x8xf32, #tpu.memory_space<vmem>>, vector<1x8x8xf32>,
      %cst_147 = arith.constant 0.000000e+00 : f32
      %186 = vector.broadcast %cst_147 : f32 to vector<4x8x8xf32>
      %c0_148 = arith.constant 0 : index
      %c0_149 = arith.constant 0 : index
      %c0_150 = arith.constant 0 : index
      %187 = vector.load %arg8[%c0_148, %c0_149, %c0_150] : memref<4x8x8xf32, #tpu.memory_space<vmem>>, vector<4x8x8xf32>
      tpu.vector_store %arg8[%c0_148, %c0_149, %c0_150], %186 {strides = array<i32>} : memref<4x8x8xf32, #tpu.memory_space<vmem>>, vector<4x8x8xf32>,
      %cst_151 = arith.constant 0xFF800000 : f32
      %188 = vector.broadcast %cst_151 : f32 to vector<4x8x1xf32>
      %c0_152 = arith.constant 0 : index
      %c0_153 = arith.constant 0 : index
      %c0_154 = arith.constant 0 : index
      %189 = vector.load %arg9[%c0_152, %c0_153, %c0_154] : memref<4x8x1xf32, #tpu.memory_space<vmem>>, vector<4x8x1xf32>
      tpu.vector_store %arg9[%c0_152, %c0_153, %c0_154], %188 {strides = array<i32>} : memref<4x8x1xf32, #tpu.memory_space<vmem>>, vector<4x8x1xf32>,
      %cst_155 = arith.constant 0.000000e+00 : f32
      %190 = vector.broadcast %cst_155 : f32 to vector<4x8x1xf32>
      %c0_156 = arith.constant 0 : index
      %c0_157 = arith.constant 0 : index
      %c0_158 = arith.constant 0 : index
      %191 = vector.load %arg10[%c0_156, %c0_157, %c0_158] : memref<4x8x1xf32, #tpu.memory_space<vmem>>, vector<4x8x1xf32>
      tpu.vector_store %arg10[%c0_156, %c0_157, %c0_158], %190 {strides = array<i32>} : memref<4x8x1xf32, #tpu.memory_space<vmem>>, vector<4x8x1xf32>,
    } else {
    }
    %c0 = arith.constant 0 : index
    %c0_1 = arith.constant 0 : index
    %c0_2 = arith.constant 0 : index
    %3 = vector.load %arg7[%c0, %c0_1, %c0_2] : memref<4x8x8xf32, #tpu.memory_space<vmem>>, vector<1x8x8xf32>
    %4 = vector.shape_cast %3 : vector<1x8x8xf32> to vector<8x8xf32>
    %c0_3 = arith.constant 0 : index
    %c0_4 = arith.constant 0 : index
    %c0_5 = arith.constant 0 : index
    %5 = vector.load %arg4[%c0_3, %c0_4, %c0_5] : memref<1x8x32xf32, #tpu.memory_space<vmem>>, vector<1x8x8xf32>
    %6 = vector.shape_cast %5 : vector<1x8x8xf32> to vector<8x8xf32>
    %c0_6 = arith.constant 0 : index
    %c0_7 = arith.constant 0 : index
    %c0_8 = arith.constant 0 : index
    %7 = vector.load %arg5[%c0_6, %c0_7, %c0_8] : memref<1x8x32xf32, #tpu.memory_space<vmem>>, vector<1x8x8xf32>
    %8 = vector.shape_cast %7 : vector<1x8x8xf32> to vector<8x8xf32>
    %cst = arith.constant dense<0.000000e+00> : vector<8x8xf32>
    %9 = tpu.matmul %4, %6, %cst {dimension_numbers = #tpu.dot_dimension_numbers<[1], [1], [0], [0], [0, 0, 1, 0], [], []>} : vector<8x8xf32>, vector<8x8xf32>, vector<8x8xf32> -> vector<8x8xf32>
    %c0_9 = arith.constant 0 : index
    %c0_10 = arith.constant 0 : index
    %c0_11 = arith.constant 0 : index
    %10 = vector.load %arg9[%c0_9, %c0_10, %c0_11] : memref<4x8x1xf32, #tpu.memory_space<vmem>>, vector<1x8x1xf32>
    %11 = vector.shape_cast %10 : vector<1x8x1xf32> to vector<8x1xf32>
    %c0_12 = arith.constant 0 : index
    %c0_13 = arith.constant 0 : index
    %c0_14 = arith.constant 0 : index
    %12 = vector.load %arg10[%c0_12, %c0_13, %c0_14] : memref<4x8x1xf32, #tpu.memory_space<vmem>>, vector<1x8x1xf32>
    %13 = vector.shape_cast %12 : vector<1x8x1xf32> to vector<8x1xf32>
    %cst_15 = arith.constant dense<0xFF800000> : vector<8xf32>
    %14 = vector.multi_reduction <maximumf>, %9, %cst_15 [1] : vector<8x8xf32> to vector<8xf32>
    %15 = vector.shape_cast %14 : vector<8xf32> to vector<8x1xf32>
    %16 = arith.maximumf %11, %15 : vector<8x1xf32>
    %17 = arith.subf %11, %16 : vector<8x1xf32>
    %18 = math.exp %17 : vector<8x1xf32>
    %19 = vector.broadcast %16 : vector<8x1xf32> to vector<8x8xf32>
    %20 = arith.subf %9, %19 : vector<8x8xf32>
    %21 = math.exp %20 : vector<8x8xf32>
    %22 = arith.mulf %18, %13 : vector<8x1xf32>
    %cst_16 = arith.constant dense<0.000000e+00> : vector<8xf32>
    %23 = vector.multi_reduction <add>, %21, %cst_16 [1] : vector<8x8xf32> to vector<8xf32>
    %24 = vector.shape_cast %23 : vector<8xf32> to vector<8x1xf32>
    %25 = arith.addf %22, %24 : vector<8x1xf32>
    %c0_17 = arith.constant 0 : index
    %c0_18 = arith.constant 0 : index
    %c0_19 = arith.constant 0 : index
    %26 = vector.load %arg10[%c0_17, %c0_18, %c0_19] : memref<4x8x1xf32, #tpu.memory_space<vmem>>, vector<1x8x1xf32>
    %27 = vector.shape_cast %26 : vector<1x8x1xf32> to vector<8x1xf32>
    %28 = vector.shape_cast %25 : vector<8x1xf32> to vector<1x8x1xf32>
    tpu.vector_store %arg10[%c0_17, %c0_18, %c0_19], %28 {strides = array<i32>} : memref<4x8x1xf32, #tpu.memory_space<vmem>>, vector<1x8x1xf32>,
    %c0_20 = arith.constant 0 : index
    %c0_21 = arith.constant 0 : index
    %c0_22 = arith.constant 0 : index
    %29 = vector.load %arg9[%c0_20, %c0_21, %c0_22] : memref<4x8x1xf32, #tpu.memory_space<vmem>>, vector<1x8x1xf32>
    %30 = vector.shape_cast %29 : vector<1x8x1xf32> to vector<8x1xf32>
    %31 = vector.shape_cast %16 : vector<8x1xf32> to vector<1x8x1xf32>
    tpu.vector_store %arg9[%c0_20, %c0_21, %c0_22], %31 {strides = array<i32>} : memref<4x8x1xf32, #tpu.memory_space<vmem>>, vector<1x8x1xf32>,
    %cst_23 = arith.constant dense<0.000000e+00> : vector<8x8xf32>
    %32 = tpu.matmul %21, %8, %cst_23 {dimension_numbers = #tpu.dot_dimension_numbers<[1], [0], [0], [1], [0, 0, 1, 1], [], []>} : vector<8x8xf32>, vector<8x8xf32>, vector<8x8xf32> -> vector<8x8xf32>
    %c0_24 = arith.constant 0 : index
    %c0_25 = arith.constant 0 : index
    %c0_26 = arith.constant 0 : index
    %33 = vector.load %arg8[%c0_24, %c0_25, %c0_26] : memref<4x8x8xf32, #tpu.memory_space<vmem>>, vector<1x8x8xf32>
    %34 = vector.shape_cast %33 : vector<1x8x8xf32> to vector<8x8xf32>
    %35 = vector.broadcast %18 : vector<8x1xf32> to vector<8x8xf32>
    %36 = arith.mulf %35, %34 : vector<8x8xf32>
    %37 = arith.addf %36, %32 : vector<8x8xf32>
    %c0_27 = arith.constant 0 : index
    %c0_28 = arith.constant 0 : index
    %c0_29 = arith.constant 0 : index
    %38 = vector.load %arg8[%c0_27, %c0_28, %c0_29] : memref<4x8x8xf32, #tpu.memory_space<vmem>>, vector<1x8x8xf32>
    %39 = vector.shape_cast %38 : vector<1x8x8xf32> to vector<8x8xf32>
    %40 = vector.shape_cast %37 : vector<8x8xf32> to vector<1x8x8xf32>
    tpu.vector_store %arg8[%c0_27, %c0_28, %c0_29], %40 {strides = array<i32>} : memref<4x8x8xf32, #tpu.memory_space<vmem>>, vector<1x8x8xf32>,
    %c1 = arith.constant 1 : index
    %c0_30 = arith.constant 0 : index
    %c0_31 = arith.constant 0 : index
    %41 = vector.load %arg7[%c1, %c0_30, %c0_31] : memref<4x8x8xf32, #tpu.memory_space<vmem>>, vector<1x8x8xf32>
    %42 = vector.shape_cast %41 : vector<1x8x8xf32> to vector<8x8xf32>
    %c0_32 = arith.constant 0 : index
    %c0_33 = arith.constant 0 : index
    %c8 = arith.constant 8 : index
    %43 = vector.load %arg4[%c0_32, %c0_33, %c8] : memref<1x8x32xf32, #tpu.memory_space<vmem>>, vector<1x8x8xf32>
    %44 = vector.shape_cast %43 : vector<1x8x8xf32> to vector<8x8xf32>
    %c0_34 = arith.constant 0 : index
    %c0_35 = arith.constant 0 : index
    %c8_36 = arith.constant 8 : index
    %45 = vector.load %arg5[%c0_34, %c0_35, %c8_36] : memref<1x8x32xf32, #tpu.memory_space<vmem>>, vector<1x8x8xf32>
    %46 = vector.shape_cast %45 : vector<1x8x8xf32> to vector<8x8xf32>
    %cst_37 = arith.constant dense<0.000000e+00> : vector<8x8xf32>
    %47 = tpu.matmul %42, %44, %cst_37 {dimension_numbers = #tpu.dot_dimension_numbers<[1], [1], [0], [0], [0, 0, 1, 0], [], []>} : vector<8x8xf32>, vector<8x8xf32>, vector<8x8xf32> -> vector<8x8xf32>
    %c1_38 = arith.constant 1 : index
    %c0_39 = arith.constant 0 : index
    %c0_40 = arith.constant 0 : index
    %48 = vector.load %arg9[%c1_38, %c0_39, %c0_40] : memref<4x8x1xf32, #tpu.memory_space<vmem>>, vector<1x8x1xf32>
    %49 = vector.shape_cast %48 : vector<1x8x1xf32> to vector<8x1xf32>
    %c1_41 = arith.constant 1 : index
    %c0_42 = arith.constant 0 : index
    %c0_43 = arith.constant 0 : index
    %50 = vector.load %arg10[%c1_41, %c0_42, %c0_43] : memref<4x8x1xf32, #tpu.memory_space<vmem>>, vector<1x8x1xf32>
    %51 = vector.shape_cast %50 : vector<1x8x1xf32> to vector<8x1xf32>
    %cst_44 = arith.constant dense<0xFF800000> : vector<8xf32>
    %52 = vector.multi_reduction <maximumf>, %47, %cst_44 [1] : vector<8x8xf32> to vector<8xf32>
    %53 = vector.shape_cast %52 : vector<8xf32> to vector<8x1xf32>
    %54 = arith.maximumf %49, %53 : vector<8x1xf32>
    %55 = arith.subf %49, %54 : vector<8x1xf32>
    %56 = math.exp %55 : vector<8x1xf32>
    %57 = vector.broadcast %54 : vector<8x1xf32> to vector<8x8xf32>
    %58 = arith.subf %47, %57 : vector<8x8xf32>
    %59 = math.exp %58 : vector<8x8xf32>
    %60 = arith.mulf %56, %51 : vector<8x1xf32>
    %cst_45 = arith.constant dense<0.000000e+00> : vector<8xf32>
    %61 = vector.multi_reduction <add>, %59, %cst_45 [1] : vector<8x8xf32> to vector<8xf32>
    %62 = vector.shape_cast %61 : vector<8xf32> to vector<8x1xf32>
    %63 = arith.addf %60, %62 : vector<8x1xf32>
    %c1_46 = arith.constant 1 : index
    %c0_47 = arith.constant 0 : index
    %c0_48 = arith.constant 0 : index
    %64 = vector.load %arg10[%c1_46, %c0_47, %c0_48] : memref<4x8x1xf32, #tpu.memory_space<vmem>>, vector<1x8x1xf32>
    %65 = vector.shape_cast %64 : vector<1x8x1xf32> to vector<8x1xf32>
    %66 = vector.shape_cast %63 : vector<8x1xf32> to vector<1x8x1xf32>
    tpu.vector_store %arg10[%c1_46, %c0_47, %c0_48], %66 {strides = array<i32>} : memref<4x8x1xf32, #tpu.memory_space<vmem>>, vector<1x8x1xf32>,
    %c1_49 = arith.constant 1 : index
    %c0_50 = arith.constant 0 : index
    %c0_51 = arith.constant 0 : index
    %67 = vector.load %arg9[%c1_49, %c0_50, %c0_51] : memref<4x8x1xf32, #tpu.memory_space<vmem>>, vector<1x8x1xf32>
    %68 = vector.shape_cast %67 : vector<1x8x1xf32> to vector<8x1xf32>
    %69 = vector.shape_cast %54 : vector<8x1xf32> to vector<1x8x1xf32>
    tpu.vector_store %arg9[%c1_49, %c0_50, %c0_51], %69 {strides = array<i32>} : memref<4x8x1xf32, #tpu.memory_space<vmem>>, vector<1x8x1xf32>,
    %cst_52 = arith.constant dense<0.000000e+00> : vector<8x8xf32>
    %70 = tpu.matmul %59, %46, %cst_52 {dimension_numbers = #tpu.dot_dimension_numbers<[1], [0], [0], [1], [0, 0, 1, 1], [], []>} : vector<8x8xf32>, vector<8x8xf32>, vector<8x8xf32> -> vector<8x8xf32>
    %c1_53 = arith.constant 1 : index
    %c0_54 = arith.constant 0 : index
    %c0_55 = arith.constant 0 : index
    %71 = vector.load %arg8[%c1_53, %c0_54, %c0_55] : memref<4x8x8xf32, #tpu.memory_space<vmem>>, vector<1x8x8xf32>
    %72 = vector.shape_cast %71 : vector<1x8x8xf32> to vector<8x8xf32>
    %73 = vector.broadcast %56 : vector<8x1xf32> to vector<8x8xf32>
    %74 = arith.mulf %73, %72 : vector<8x8xf32>
    %75 = arith.addf %74, %70 : vector<8x8xf32>
    %c1_56 = arith.constant 1 : index
    %c0_57 = arith.constant 0 : index
    %c0_58 = arith.constant 0 : index
    %76 = vector.load %arg8[%c1_56, %c0_57, %c0_58] : memref<4x8x8xf32, #tpu.memory_space<vmem>>, vector<1x8x8xf32>
    %77 = vector.shape_cast %76 : vector<1x8x8xf32> to vector<8x8xf32>
    %78 = vector.shape_cast %75 : vector<8x8xf32> to vector<1x8x8xf32>
    tpu.vector_store %arg8[%c1_56, %c0_57, %c0_58], %78 {strides = array<i32>} : memref<4x8x8xf32, #tpu.memory_space<vmem>>, vector<1x8x8xf32>,
    %c2 = arith.constant 2 : index
    %c0_59 = arith.constant 0 : index
    %c0_60 = arith.constant 0 : index
    %79 = vector.load %arg7[%c2, %c0_59, %c0_60] : memref<4x8x8xf32, #tpu.memory_space<vmem>>, vector<1x8x8xf32>
    %80 = vector.shape_cast %79 : vector<1x8x8xf32> to vector<8x8xf32>
    %c0_61 = arith.constant 0 : index
    %c0_62 = arith.constant 0 : index
    %c16 = arith.constant 16 : index
    %81 = vector.load %arg4[%c0_61, %c0_62, %c16] : memref<1x8x32xf32, #tpu.memory_space<vmem>>, vector<1x8x8xf32>
    %82 = vector.shape_cast %81 : vector<1x8x8xf32> to vector<8x8xf32>
    %c0_63 = arith.constant 0 : index
    %c0_64 = arith.constant 0 : index
    %c16_65 = arith.constant 16 : index
    %83 = vector.load %arg5[%c0_63, %c0_64, %c16_65] : memref<1x8x32xf32, #tpu.memory_space<vmem>>, vector<1x8x8xf32>
    %84 = vector.shape_cast %83 : vector<1x8x8xf32> to vector<8x8xf32>
    %cst_66 = arith.constant dense<0.000000e+00> : vector<8x8xf32>
    %85 = tpu.matmul %80, %82, %cst_66 {dimension_numbers = #tpu.dot_dimension_numbers<[1], [1], [0], [0], [0, 0, 1, 0], [], []>} : vector<8x8xf32>, vector<8x8xf32>, vector<8x8xf32> -> vector<8x8xf32>
    %c2_67 = arith.constant 2 : index
    %c0_68 = arith.constant 0 : index
    %c0_69 = arith.constant 0 : index
    %86 = vector.load %arg9[%c2_67, %c0_68, %c0_69] : memref<4x8x1xf32, #tpu.memory_space<vmem>>, vector<1x8x1xf32>
    %87 = vector.shape_cast %86 : vector<1x8x1xf32> to vector<8x1xf32>
    %c2_70 = arith.constant 2 : index
    %c0_71 = arith.constant 0 : index
    %c0_72 = arith.constant 0 : index
    %88 = vector.load %arg10[%c2_70, %c0_71, %c0_72] : memref<4x8x1xf32, #tpu.memory_space<vmem>>, vector<1x8x1xf32>
    %89 = vector.shape_cast %88 : vector<1x8x1xf32> to vector<8x1xf32>
    %cst_73 = arith.constant dense<0xFF800000> : vector<8xf32>
    %90 = vector.multi_reduction <maximumf>, %85, %cst_73 [1] : vector<8x8xf32> to vector<8xf32>
    %91 = vector.shape_cast %90 : vector<8xf32> to vector<8x1xf32>
    %92 = arith.maximumf %87, %91 : vector<8x1xf32>
    %93 = arith.subf %87, %92 : vector<8x1xf32>
    %94 = math.exp %93 : vector<8x1xf32>
    %95 = vector.broadcast %92 : vector<8x1xf32> to vector<8x8xf32>
    %96 = arith.subf %85, %95 : vector<8x8xf32>
    %97 = math.exp %96 : vector<8x8xf32>
    %98 = arith.mulf %94, %89 : vector<8x1xf32>
    %cst_74 = arith.constant dense<0.000000e+00> : vector<8xf32>
    %99 = vector.multi_reduction <add>, %97, %cst_74 [1] : vector<8x8xf32> to vector<8xf32>
    %100 = vector.shape_cast %99 : vector<8xf32> to vector<8x1xf32>
    %101 = arith.addf %98, %100 : vector<8x1xf32>
    %c2_75 = arith.constant 2 : index
    %c0_76 = arith.constant 0 : index
    %c0_77 = arith.constant 0 : index
    %102 = vector.load %arg10[%c2_75, %c0_76, %c0_77] : memref<4x8x1xf32, #tpu.memory_space<vmem>>, vector<1x8x1xf32>
    %103 = vector.shape_cast %102 : vector<1x8x1xf32> to vector<8x1xf32>
    %104 = vector.shape_cast %101 : vector<8x1xf32> to vector<1x8x1xf32>
    tpu.vector_store %arg10[%c2_75, %c0_76, %c0_77], %104 {strides = array<i32>} : memref<4x8x1xf32, #tpu.memory_space<vmem>>, vector<1x8x1xf32>,
    %c2_78 = arith.constant 2 : index
    %c0_79 = arith.constant 0 : index
    %c0_80 = arith.constant 0 : index
    %105 = vector.load %arg9[%c2_78, %c0_79, %c0_80] : memref<4x8x1xf32, #tpu.memory_space<vmem>>, vector<1x8x1xf32>
    %106 = vector.shape_cast %105 : vector<1x8x1xf32> to vector<8x1xf32>
    %107 = vector.shape_cast %92 : vector<8x1xf32> to vector<1x8x1xf32>
    tpu.vector_store %arg9[%c2_78, %c0_79, %c0_80], %107 {strides = array<i32>} : memref<4x8x1xf32, #tpu.memory_space<vmem>>, vector<1x8x1xf32>,
    %cst_81 = arith.constant dense<0.000000e+00> : vector<8x8xf32>
    %108 = tpu.matmul %97, %84, %cst_81 {dimension_numbers = #tpu.dot_dimension_numbers<[1], [0], [0], [1], [0, 0, 1, 1], [], []>} : vector<8x8xf32>, vector<8x8xf32>, vector<8x8xf32> -> vector<8x8xf32>
    %c2_82 = arith.constant 2 : index
    %c0_83 = arith.constant 0 : index
    %c0_84 = arith.constant 0 : index
    %109 = vector.load %arg8[%c2_82, %c0_83, %c0_84] : memref<4x8x8xf32, #tpu.memory_space<vmem>>, vector<1x8x8xf32>
    %110 = vector.shape_cast %109 : vector<1x8x8xf32> to vector<8x8xf32>
    %111 = vector.broadcast %94 : vector<8x1xf32> to vector<8x8xf32>
    %112 = arith.mulf %111, %110 : vector<8x8xf32>
    %113 = arith.addf %112, %108 : vector<8x8xf32>
    %c2_85 = arith.constant 2 : index
    %c0_86 = arith.constant 0 : index
    %c0_87 = arith.constant 0 : index
    %114 = vector.load %arg8[%c2_85, %c0_86, %c0_87] : memref<4x8x8xf32, #tpu.memory_space<vmem>>, vector<1x8x8xf32>
    %115 = vector.shape_cast %114 : vector<1x8x8xf32> to vector<8x8xf32>
    %116 = vector.shape_cast %113 : vector<8x8xf32> to vector<1x8x8xf32>
    tpu.vector_store %arg8[%c2_85, %c0_86, %c0_87], %116 {strides = array<i32>} : memref<4x8x8xf32, #tpu.memory_space<vmem>>, vector<1x8x8xf32>,
    %c3 = arith.constant 3 : index
    %c0_88 = arith.constant 0 : index
    %c0_89 = arith.constant 0 : index
    %117 = vector.load %arg7[%c3, %c0_88, %c0_89] : memref<4x8x8xf32, #tpu.memory_space<vmem>>, vector<1x8x8xf32>
    %118 = vector.shape_cast %117 : vector<1x8x8xf32> to vector<8x8xf32>
    %c0_90 = arith.constant 0 : index
    %c0_91 = arith.constant 0 : index
    %c24 = arith.constant 24 : index
    %119 = vector.load %arg4[%c0_90, %c0_91, %c24] : memref<1x8x32xf32, #tpu.memory_space<vmem>>, vector<1x8x8xf32>
    %120 = vector.shape_cast %119 : vector<1x8x8xf32> to vector<8x8xf32>
    %c0_92 = arith.constant 0 : index
    %c0_93 = arith.constant 0 : index
    %c24_94 = arith.constant 24 : index
    %121 = vector.load %arg5[%c0_92, %c0_93, %c24_94] : memref<1x8x32xf32, #tpu.memory_space<vmem>>, vector<1x8x8xf32>
    %122 = vector.shape_cast %121 : vector<1x8x8xf32> to vector<8x8xf32>
    %cst_95 = arith.constant dense<0.000000e+00> : vector<8x8xf32>
    %123 = tpu.matmul %118, %120, %cst_95 {dimension_numbers = #tpu.dot_dimension_numbers<[1], [1], [0], [0], [0, 0, 1, 0], [], []>} : vector<8x8xf32>, vector<8x8xf32>, vector<8x8xf32> -> vector<8x8xf32>
    %c3_96 = arith.constant 3 : index
    %c0_97 = arith.constant 0 : index
    %c0_98 = arith.constant 0 : index
    %124 = vector.load %arg9[%c3_96, %c0_97, %c0_98] : memref<4x8x1xf32, #tpu.memory_space<vmem>>, vector<1x8x1xf32>
    %125 = vector.shape_cast %124 : vector<1x8x1xf32> to vector<8x1xf32>
    %c3_99 = arith.constant 3 : index
    %c0_100 = arith.constant 0 : index
    %c0_101 = arith.constant 0 : index
    %126 = vector.load %arg10[%c3_99, %c0_100, %c0_101] : memref<4x8x1xf32, #tpu.memory_space<vmem>>, vector<1x8x1xf32>
    %127 = vector.shape_cast %126 : vector<1x8x1xf32> to vector<8x1xf32>
    %cst_102 = arith.constant dense<0xFF800000> : vector<8xf32>
    %128 = vector.multi_reduction <maximumf>, %123, %cst_102 [1] : vector<8x8xf32> to vector<8xf32>
    %129 = vector.shape_cast %128 : vector<8xf32> to vector<8x1xf32>
    %130 = arith.maximumf %125, %129 : vector<8x1xf32>
    %131 = arith.subf %125, %130 : vector<8x1xf32>
    %132 = math.exp %131 : vector<8x1xf32>
    %133 = vector.broadcast %130 : vector<8x1xf32> to vector<8x8xf32>
    %134 = arith.subf %123, %133 : vector<8x8xf32>
    %135 = math.exp %134 : vector<8x8xf32>
    %136 = arith.mulf %132, %127 : vector<8x1xf32>
    %cst_103 = arith.constant dense<0.000000e+00> : vector<8xf32>
    %137 = vector.multi_reduction <add>, %135, %cst_103 [1] : vector<8x8xf32> to vector<8xf32>
    %138 = vector.shape_cast %137 : vector<8xf32> to vector<8x1xf32>
    %139 = arith.addf %136, %138 : vector<8x1xf32>
    %c3_104 = arith.constant 3 : index
    %c0_105 = arith.constant 0 : index
    %c0_106 = arith.constant 0 : index
    %140 = vector.load %arg10[%c3_104, %c0_105, %c0_106] : memref<4x8x1xf32, #tpu.memory_space<vmem>>, vector<1x8x1xf32>
    %141 = vector.shape_cast %140 : vector<1x8x1xf32> to vector<8x1xf32>
    %142 = vector.shape_cast %139 : vector<8x1xf32> to vector<1x8x1xf32>
    tpu.vector_store %arg10[%c3_104, %c0_105, %c0_106], %142 {strides = array<i32>} : memref<4x8x1xf32, #tpu.memory_space<vmem>>, vector<1x8x1xf32>,
    %c3_107 = arith.constant 3 : index
    %c0_108 = arith.constant 0 : index
    %c0_109 = arith.constant 0 : index
    %143 = vector.load %arg9[%c3_107, %c0_108, %c0_109] : memref<4x8x1xf32, #tpu.memory_space<vmem>>, vector<1x8x1xf32>
    %144 = vector.shape_cast %143 : vector<1x8x1xf32> to vector<8x1xf32>
    %145 = vector.shape_cast %130 : vector<8x1xf32> to vector<1x8x1xf32>
    tpu.vector_store %arg9[%c3_107, %c0_108, %c0_109], %145 {strides = array<i32>} : memref<4x8x1xf32, #tpu.memory_space<vmem>>, vector<1x8x1xf32>,
    %cst_110 = arith.constant dense<0.000000e+00> : vector<8x8xf32>
    %146 = tpu.matmul %135, %122, %cst_110 {dimension_numbers = #tpu.dot_dimension_numbers<[1], [0], [0], [1], [0, 0, 1, 1], [], []>} : vector<8x8xf32>, vector<8x8xf32>, vector<8x8xf32> -> vector<8x8xf32>
    %c3_111 = arith.constant 3 : index
    %c0_112 = arith.constant 0 : index
    %c0_113 = arith.constant 0 : index
    %147 = vector.load %arg8[%c3_111, %c0_112, %c0_113] : memref<4x8x8xf32, #tpu.memory_space<vmem>>, vector<1x8x8xf32>
    %148 = vector.shape_cast %147 : vector<1x8x8xf32> to vector<8x8xf32>
    %149 = vector.broadcast %132 : vector<8x1xf32> to vector<8x8xf32>
    %150 = arith.mulf %149, %148 : vector<8x8xf32>
    %151 = arith.addf %150, %146 : vector<8x8xf32>
    %c3_114 = arith.constant 3 : index
    %c0_115 = arith.constant 0 : index
    %c0_116 = arith.constant 0 : index
    %152 = vector.load %arg8[%c3_114, %c0_115, %c0_116] : memref<4x8x8xf32, #tpu.memory_space<vmem>>, vector<1x8x8xf32>
    %153 = vector.shape_cast %152 : vector<1x8x8xf32> to vector<8x8xf32>
    %154 = vector.shape_cast %151 : vector<8x8xf32> to vector<1x8x8xf32>
    tpu.vector_store %arg8[%c3_114, %c0_115, %c0_116], %154 {strides = array<i32>} : memref<4x8x8xf32, #tpu.memory_space<vmem>>, vector<1x8x8xf32>,
    %c0_i32_117 = arith.constant 0 : i32
    %155 = arith.cmpi eq, %arg2, %c0_i32_117 : i32
    %156 = arith.extui %155 : i1 to i32
    %c0_i32_118 = arith.constant 0 : i32
    %157 = arith.cmpi ne, %156, %c0_i32_118 : i32
    scf.if %157 {
      %c0_119 = arith.constant 0 : index
      %c0_120 = arith.constant 0 : index
      %c0_121 = arith.constant 0 : index
      %158 = vector.load %arg8[%c0_119, %c0_120, %c0_121] : memref<4x8x8xf32, #tpu.memory_space<vmem>>, vector<1x8x8xf32>
      %159 = vector.shape_cast %158 : vector<1x8x8xf32> to vector<8x8xf32>
      %c0_122 = arith.constant 0 : index
      %c0_123 = arith.constant 0 : index
      %c0_124 = arith.constant 0 : index
      %160 = vector.load %arg10[%c0_122, %c0_123, %c0_124] : memref<4x8x1xf32, #tpu.memory_space<vmem>>, vector<1x8x1xf32>
      %161 = vector.shape_cast %160 : vector<1x8x1xf32> to vector<8x1xf32>
      %162 = vector.broadcast %161 : vector<8x1xf32> to vector<8x8xf32>
      %163 = arith.divf %159, %162 : vector<8x8xf32>
      %c1_125 = arith.constant 1 : index
      %c0_126 = arith.constant 0 : index
      %c0_127 = arith.constant 0 : index
      %164 = vector.load %arg8[%c1_125, %c0_126, %c0_127] : memref<4x8x8xf32, #tpu.memory_space<vmem>>, vector<1x8x8xf32>
      %165 = vector.shape_cast %164 : vector<1x8x8xf32> to vector<8x8xf32>
      %c1_128 = arith.constant 1 : index
      %c0_129 = arith.constant 0 : index
      %c0_130 = arith.constant 0 : index
      %166 = vector.load %arg10[%c1_128, %c0_129, %c0_130] : memref<4x8x1xf32, #tpu.memory_space<vmem>>, vector<1x8x1xf32>
      %167 = vector.shape_cast %166 : vector<1x8x1xf32> to vector<8x1xf32>
      %168 = vector.broadcast %167 : vector<8x1xf32> to vector<8x8xf32>
      %169 = arith.divf %165, %168 : vector<8x8xf32>
      %c2_131 = arith.constant 2 : index
      %c0_132 = arith.constant 0 : index
      %c0_133 = arith.constant 0 : index
      %170 = vector.load %arg8[%c2_131, %c0_132, %c0_133] : memref<4x8x8xf32, #tpu.memory_space<vmem>>, vector<1x8x8xf32>
      %171 = vector.shape_cast %170 : vector<1x8x8xf32> to vector<8x8xf32>
      %c2_134 = arith.constant 2 : index
      %c0_135 = arith.constant 0 : index
      %c0_136 = arith.constant 0 : index
      %172 = vector.load %arg10[%c2_134, %c0_135, %c0_136] : memref<4x8x1xf32, #tpu.memory_space<vmem>>, vector<1x8x1xf32>
      %173 = vector.shape_cast %172 : vector<1x8x1xf32> to vector<8x1xf32>
      %174 = vector.broadcast %173 : vector<8x1xf32> to vector<8x8xf32>
      %175 = arith.divf %171, %174 : vector<8x8xf32>
      %c3_137 = arith.constant 3 : index
      %c0_138 = arith.constant 0 : index
      %c0_139 = arith.constant 0 : index
      %176 = vector.load %arg8[%c3_137, %c0_138, %c0_139] : memref<4x8x8xf32, #tpu.memory_space<vmem>>, vector<1x8x8xf32>
      %177 = vector.shape_cast %176 : vector<1x8x8xf32> to vector<8x8xf32>
      %c3_140 = arith.constant 3 : index
      %c0_141 = arith.constant 0 : index
      %c0_142 = arith.constant 0 : index
      %178 = vector.load %arg10[%c3_140, %c0_141, %c0_142] : memref<4x8x1xf32, #tpu.memory_space<vmem>>, vector<1x8x1xf32>
      %179 = vector.shape_cast %178 : vector<1x8x1xf32> to vector<8x1xf32>
      %180 = vector.broadcast %179 : vector<8x1xf32> to vector<8x8xf32>
      %181 = arith.divf %177, %180 : vector<8x8xf32>
      %182 = tpu.concatenate %163, %169, %175, %181 in 1 : vector<8x8xf32>, vector<8x8xf32>, vector<8x8xf32>, vector<8x8xf32> -> vector<8x32xf32>
      %c0_143 = arith.constant 0 : index
      %c0_144 = arith.constant 0 : index
      %c0_145 = arith.constant 0 : index
      %183 = vector.load %arg6[%c0_143, %c0_144, %c0_145] : memref<1x8x32xf32, #tpu.memory_space<vmem>>, vector<1x8x32xf32>
      %184 = vector.shape_cast %183 : vector<1x8x32xf32> to vector<8x32xf32>
      %185 = vector.shape_cast %182 : vector<8x32xf32> to vector<1x8x32xf32>
      tpu.vector_store %arg6[%c0_143, %c0_144, %c0_145], %185 {strides = array<i32>} : memref<1x8x32xf32, #tpu.memory_space<vmem>>, vector<1x8x32xf32>,
    } else {
    }
    return
  }
  func.func @transform_0(%arg0: i32, %arg1: i32, %arg2: i32) -> (i32, i32, i32) {
    %c0_i32 = arith.constant 0 : i32
    %c0_i32_0 = arith.constant 0 : i32
    return %arg0, %arg1, %c0_i32 : i32, i32, i32
  }
  func.func @transform_1(%arg0: i32, %arg1: i32, %arg2: i32) -> (i32, i32, i32) {
    %c0_i32 = arith.constant 0 : i32
    %c0_i32_0 = arith.constant 0 : i32
    return %arg0, %arg2, %c0_i32 : i32, i32, i32
  }
  func.func @transform_2(%arg0: i32, %arg1: i32, %arg2: i32) -> (i32, i32, i32) {
    %c0_i32 = arith.constant 0 : i32
    %c0_i32_0 = arith.constant 0 : i32
    return %arg0, %arg2, %c0_i32 : i32, i32, i32
  }
  func.func @transform_3(%arg0: i32, %arg1: i32, %arg2: i32) -> (i32, i32, i32) {
    %c0_i32 = arith.constant 0 : i32
    %c0_i32_0 = arith.constant 0 : i32
    return %arg0, %arg1, %c0_i32 : i32, i32, i32
  }
}

</mosaic_0001>

<llo_original>
// kernel: tpu_custom_call.1
$region0: #{tpu_custom_call.1}
  #allocation0 [shape = 'u32[]', space=smem, size = 0x4, offset = 0x4, fixed_abs, tag = 'smem constant byte address 0x4 - core index']
  #allocation1 [shape = 'u32[144,128]{1,0:T(1,128)}', space=vmem, size = 0x12000, scoped, tag = 'internal scratch']
  #allocation2 [shape = 'f32[4,8,8]{2,1,0:T(8,128)}', space=vmem, size = 0x4000, scoped, tag = 'scratch operand']
  #allocation3 [shape = 'f32[4,8,8]{2,1,0:T(8,128)}', space=vmem, size = 0x4000, scoped, tag = 'scratch operand']
  #allocation4 [shape = 'f32[4,8,1]{2,1,0:T(8,128)}', space=vmem, size = 0x4000, scoped, tag = 'scratch operand']
  #allocation5 [shape = 'f32[4,8,1]{2,1,0:T(8,128)}', space=vmem, size = 0x4000, scoped, tag = 'scratch operand']
  %s0 = inlined_call_operand.hbm [shape: f32[2,8,32], index: 0, kind: input, shape index: {}]
  %s1 = inlined_call_operand.hbm [shape: f32[2,8,32], index: 1, kind: input, shape index: {}]
  %s2 = inlined_call_operand.hbm [shape: f32[2,8,32], index: 2, kind: input, shape index: {}]
  %s3 = inlined_call_operand.hbm [shape: f32[2,8,32], index: 3, kind: output, shape index: {}]
  %s4 = sld [smem:[#allocation0]]
  $region65: #{tpu_custom_call.1} parent=0
    _
  %s6 = ssub.s32 1, %s4
  %s7 = scalar_select 0, %s6, %s4
  $region1: #{tpu_custom_call.1} parent=0
    #allocation6 [shape = 'u8[8192]{0}', space=vmem, size = 0x2000, scoped, tag = 'input window, operand 0']
    #allocation7 [shape = 's32[2]{0}', space=sflag, size = 0x8, scoped, tag = 'scoped memory for tpu_custom_call.1']
    #allocation8 [shape = 's32[2]{0}', space=sflag, size = 0x8, scoped, tag = 'scoped memory for tpu_custom_call.1']
    #allocation9 [shape = 'u8[8192]{0}', space=vmem, size = 0x2000, scoped, tag = 'input window, operand 1']
    #allocation10 [shape = 's32[2]{0}', space=sflag, size = 0x8, scoped, tag = 'scoped memory for tpu_custom_call.1']
    #allocation11 [shape = 'u8[8192]{0}', space=vmem, size = 0x2000, scoped, tag = 'input window, operand 2']
    #allocation12 [shape = 'u8[8192]{0}', space=vmem, size = 0x2000, scoped, tag = 'output window, operand 0']
    %8 = vsyncpa [#allocation7], 0
    %s9 = scalar_lea.sflag [#allocation7], 1
    %10 = vsyncpa %s9, 0
    %11 = vsyncpa [#allocation10], 0
    %s12 = scalar_lea.sflag [#allocation10], 1
    %13 = vsyncpa %s12, 0
    %14 = vsyncpa [#allocation8], 0
    %s15 = scalar_lea.sflag [#allocation8], 1
    %16 = vsyncpa %s15, 0
    loop: start=0, step=1, limit=4
    $region2: #{tpu_custom_call.1} parent=1 // loop_pre_header
      _
    $region3: #{tpu_custom_call.1} parent=1 // loop_header
      %s18 = sphi 0, %s22
      %p19 = scmp.ge.s32.totalorder %s18, 4
      %s25 = sphi 0, %s44
      %s26 = sphi 0, %s40
      %s27 = sphi 0, %s36
      %s28 = sphi 0, %s25
      %s29 = sphi 0, %s26
      %s30 = sphi 0, %s27
      %s31 = sphi 0, %s28
      %s32 = sphi 0, %s29
      %s33 = sphi 0, %s30
      %s49 = sphi 0, %s51
      %s52 = sphi 0, %s49
      %s53 = sphi 0, %s52
      %s69 = sphi 0, %s53
      %s77 = sphi 0, %s79
      %s80 = sphi 0, %s77
      %s81 = sphi 0, %s80
      %s97 = sphi 0, %s81
      %s105 = sphi 0, %s107
      %s108 = sphi 0, %s105
      %s109 = sphi 0, %s108
      %s125 = sphi 0, %s109
      %s133 = sphi 0, %s135
      %s136 = sphi 0, %s133
      %s137 = sphi 0, %s136
      %s153 = sphi 0, %s137
    $region4: #{tpu_custom_call.1} parent=1 // loop_header_branch
      %21 = sbr.rel (%p19) target = $region8
    $region5: #{tpu_custom_call.1} parent=1 // loop_body
      %s23 = ssub.s32 %s18, 1
      %s24 = ssub.s32 %s18, 2
      %s34 = sadd.s32 1, %s27
      %p35 = scmp.ge.s32.totalorder %s34, 1
      %s36 = scalar_select %p35, 0, %s34
      %s37 = sadd.s32 1, %s26
      %s38 = scalar_select %p35, %s37, %s26
      %p39 = scmp.ge.s32.totalorder %s38, 1
      %s40 = scalar_select %p39, 0, %s38
      %s41 = sadd.s32 1, %s25
      %s42 = scalar_select %p39, %s41, %s25
      %p43 = scmp.ge.s32.totalorder %s42, 2
      %s44 = scalar_select %p43, 0, %s42
      %s45 = ssub.s32 %s25, %s44
      %s46 = ssub.s32 %s26, %s40
      %s47 = sor.u32 %s45, %s46
      %p48 = scmp.eq.s32.totalorder %s47, 0
      %s50 = sadd.s32 %s49, 1
      %s51 = scalar_select %p48, %s49, %s50
      %p54 = pneg %p48
      %p55 = scmp.eq.s32.totalorder %s18, 1
      %p56 = por %p54, %p55
      %p57 = scmp.ne.s32.totalorder %s49, %s52
      %p58 = scmp.eq.s32.totalorder %s18, 0
      %p59 = por %p57, %p58
      %p60 = scmp.ne.s32.totalorder %s49, %s52
      %p61 = scmp.eq.s32.totalorder %s23, 1
      %p62 = por %p60, %p61
      %p63 = scmp.ne.s32.totalorder %s52, %s53
      %p64 = scmp.eq.s32.totalorder %s23, 0
      %p65 = por %p63, %p64
      %p66 = scmp.ne.s32.totalorder %s52, %s53
      %p67 = scmp.eq.s32.totalorder %s24, 1
      %p68 = por %p66, %p67
      %p70 = scmp.ne.s32.totalorder %s53, %s69
      %p71 = scmp.eq.s32.totalorder %s24, 0
      %p72 = por %p70, %p71
      %s73 = ssub.s32 %s25, %s44
      %s74 = ssub.s32 %s27, %s36
      %s75 = sor.u32 %s73, %s74
      %p76 = scmp.eq.s32.totalorder %s75, 0
      %s78 = sadd.s32 %s77, 1
      %s79 = scalar_select %p76, %s77, %s78
      %p82 = pneg %p76
      %p83 = scmp.eq.s32.totalorder %s18, 1
      %p84 = por %p82, %p83
      %p85 = scmp.ne.s32.totalorder %s77, %s80
      %p86 = scmp.eq.s32.totalorder %s18, 0
      %p87 = por %p85, %p86
      %p88 = scmp.ne.s32.totalorder %s77, %s80
      %p89 = scmp.eq.s32.totalorder %s23, 1
      %p90 = por %p88, %p89
      %p91 = scmp.ne.s32.totalorder %s80, %s81
      %p92 = scmp.eq.s32.totalorder %s23, 0
      %p93 = por %p91, %p92
      %p94 = scmp.ne.s32.totalorder %s80, %s81
      %p95 = scmp.eq.s32.totalorder %s24, 1
      %p96 = por %p94, %p95
      %p98 = scmp.ne.s32.totalorder %s81, %s97
      %p99 = scmp.eq.s32.totalorder %s24, 0
      %p100 = por %p98, %p99
      %s101 = ssub.s32 %s25, %s44
      %s102 = ssub.s32 %s27, %s36
      %s103 = sor.u32 %s101, %s102
      %p104 = scmp.eq.s32.totalorder %s103, 0
      %s106 = sadd.s32 %s105, 1
      %s107 = scalar_select %p104, %s105, %s106
      %p110 = pneg %p104
      %p111 = scmp.eq.s32.totalorder %s18, 1
      %p112 = por %p110, %p111
      %p113 = scmp.ne.s32.totalorder %s105, %s108
      %p114 = scmp.eq.s32.totalorder %s18, 0
      %p115 = por %p113, %p114
      %p116 = scmp.ne.s32.totalorder %s105, %s108
      %p117 = scmp.eq.s32.totalorder %s23, 1
      %p118 = por %p116, %p117
      %p119 = scmp.ne.s32.totalorder %s108, %s109
      %p120 = scmp.eq.s32.totalorder %s23, 0
      %p121 = por %p119, %p120
      %p122 = scmp.ne.s32.totalorder %s108, %s109
      %p123 = scmp.eq.s32.totalorder %s24, 1
      %p124 = por %p122, %p123
      %p126 = scmp.ne.s32.totalorder %s109, %s125
      %p127 = scmp.eq.s32.totalorder %s24, 0
      %p128 = por %p126, %p127
      %s129 = ssub.s32 %s25, %s44
      %s130 = ssub.s32 %s26, %s40
      %s131 = sor.u32 %s129, %s130
      %p132 = scmp.eq.s32.totalorder %s131, 0
      %s134 = sadd.s32 %s133, 1
      %s135 = scalar_select %p132, %s133, %s134
      %p138 = pneg %p132
      %p139 = scmp.eq.s32.totalorder %s18, 1
      %p140 = por %p138, %p139
      %p141 = scmp.ne.s32.totalorder %s133, %s136
      %p142 = scmp.eq.s32.totalorder %s18, 0
      %p143 = por %p141, %p142
      %p144 = scmp.ne.s32.totalorder %s133, %s136
      %p145 = scmp.eq.s32.totalorder %s23, 1
      %p146 = por %p144, %p145
      %p147 = scmp.ne.s32.totalorder %s136, %s137
      %p148 = scmp.eq.s32.totalorder %s23, 0
      %p149 = por %p147, %p148
      %p150 = scmp.ne.s32.totalorder %s136, %s137
      %p151 = scmp.eq.s32.totalorder %s24, 1
      %p152 = por %p150, %p151
      %p154 = scmp.ne.s32.totalorder %s137, %s153
      %p155 = scmp.eq.s32.totalorder %s24, 0
      %p156 = por %p154, %p155
      %p157 = scmp.le.s32.totalorder 1, %s18
      %p158 = scmp.lt.s32.totalorder %s18, 3
      %p159 = pnand %p157, %p158
      %p160 = pneg %p159
      // Predicated region
      $region9: #{tpu_custom_call.1} parent=5 // pred_check
        _
      $region10: #{tpu_custom_call.1} parent=5 // pred_check_branch
        %162 = sbr.rel (%p159) target = $region12
      $region11: #{tpu_custom_call.1} parent=5 // pred_region
        %s163 = ssub.s32 %s18, 1
      $region12: #{tpu_custom_call.1} parent=5 // pred_fallthru
        _
      %p164 = scmp.lt.s32.totalorder %s18, 2
      // Predicated region
      $region13: #{tpu_custom_call.1} parent=5 // pred_check
        %p165 = pneg %p164
      $region14: #{tpu_custom_call.1} parent=5 // pred_check_branch
        %167 = sbr.rel (%p165) target = $region16
      $region15: #{tpu_custom_call.1} parent=5 // pred_region
        // Predicated region
        $region17: #{tpu_custom_call.1} parent=15 // pred_check
          %p168 = pneg %p59
        $region18: #{tpu_custom_call.1} parent=15 // pred_check_branch
          %170 = sbr.rel (%p168) target = $region20
        $region19: #{tpu_custom_call.1} parent=15 // pred_region
          %s171 = sand.u32 %s49, 1
          %s172 = scalar_lea.sflag [#allocation7], %s171
          %s173 = sand.u32 %s49, 1
          %s174 = smul.addr %s173, 8
          %s175 = scalar_lea.vmem [#allocation6], %s174
          %s177 = ssub.s32 128, 128
          %178 = vsyncadd %s172, %s177
          %s179 = sadd.s32 %s26, %s25
          %s180 = smul.addr %s179, 128
          %s181 = scalar_lea.hbm %s0, %s180
          %s183 = sshll.u32 %s175, 4
          %s184 = int_to_ptr.vmem [resolvable:$true] %s183
          %186 = dma.hbm_to_vmem [thread:$0]  %s181, 128, %s184, %s172
        $region20: #{tpu_custom_call.1} parent=15 // pred_fallthru
          _
        // Predicated region
        $region21: #{tpu_custom_call.1} parent=15 // pred_check
          %p187 = pneg %p87
        $region22: #{tpu_custom_call.1} parent=15 // pred_check_branch
          %189 = sbr.rel (%p187) target = $region24
        $region23: #{tpu_custom_call.1} parent=15 // pred_region
          %s190 = sand.u32 %s18, 1
          %s191 = scalar_lea.sflag [#allocation10], %s190
          %s192 = sand.u32 %s77, 1
          %s193 = smul.addr %s192, 8
          %s194 = scalar_lea.vmem [#allocation9], %s193
          %s196 = ssub.s32 128, 128
          %197 = vsyncadd %s191, %s196
          %s198 = sadd.s32 %s27, %s25
          %s199 = smul.addr %s198, 128
          %s200 = scalar_lea.hbm %s1, %s199
          %s202 = sshll.u32 %s194, 4
          %s203 = int_to_ptr.vmem [resolvable:$true] %s202
          %205 = dma.hbm_to_vmem [thread:$0]  %s200, 128, %s203, %s191
        $region24: #{tpu_custom_call.1} parent=15 // pred_fallthru
          _
        // Predicated region
        $region25: #{tpu_custom_call.1} parent=15 // pred_check
          %p206 = pneg %p115
        $region26: #{tpu_custom_call.1} parent=15 // pred_check_branch
          %208 = sbr.rel (%p206) target = $region28
        $region27: #{tpu_custom_call.1} parent=15 // pred_region
          %s209 = sand.u32 %s18, 1
          %s210 = scalar_lea.sflag [#allocation10], %s209
          %s211 = sand.u32 %s105, 1
          %s212 = smul.addr %s211, 8
          %s213 = scalar_lea.vmem [#allocation11], %s212
          %s215 = ssub.s32 128, 128
          %216 = vsyncadd %s210, %s215
          %s217 = sadd.s32 %s27, %s25
          %s218 = smul.addr %s217, 128
          %s219 = scalar_lea.hbm %s2, %s218
          %s221 = sshll.u32 %s213, 4
          %s222 = int_to_ptr.vmem [resolvable:$true] %s221
          %224 = dma.hbm_to_vmem [thread:$0]  %s219, 128, %s222, %s210
        $region28: #{tpu_custom_call.1} parent=15 // pred_fallthru
          _
      $region16: #{tpu_custom_call.1} parent=5 // pred_fallthru
        _
      %p225 = scmp.le.s32.totalorder 1, %s18
      %p226 = scmp.lt.s32.totalorder %s18, 3
      %p227 = pnand %p225, %p226
      %p228 = pneg %p227
      // Predicated region
      $region29: #{tpu_custom_call.1} parent=5 // pred_check
        _
      $region30: #{tpu_custom_call.1} parent=5 // pred_check_branch
        %230 = sbr.rel (%p227) target = $region32
      $region31: #{tpu_custom_call.1} parent=5 // pred_region
        %s231 = ssub.s32 %s18, 1
        %s232 = sand.u32 %s52, 1
        %s233 = scalar_lea.sflag [#allocation7], %s232
        %s234 = sand.u32 %s52, 1
        %s235 = smul.addr %s234, 8
        %s236 = scalar_lea.vmem [#allocation6], %s235
        // Predicated region
        $region33: #{tpu_custom_call.1} parent=31 // pred_check
          %p237 = pneg %p65
        $region34: #{tpu_custom_call.1} parent=31 // pred_check_branch
          %239 = sbr.rel (%p237) target = $region36
        $region35: #{tpu_custom_call.1} parent=31 // pred_region
          %240 = dma.done %s233, 128
        $region36: #{tpu_custom_call.1} parent=31 // pred_fallthru
          _
        %s241 = sand.u32 %s23, 1
        %s242 = scalar_lea.sflag [#allocation10], %s241
        %s243 = sand.u32 %s80, 1
        %s244 = smul.addr %s243, 8
        %s245 = scalar_lea.vmem [#allocation9], %s244
        // Predicated region
        $region37: #{tpu_custom_call.1} parent=31 // pred_check
          %p246 = pneg %p93
        $region38: #{tpu_custom_call.1} parent=31 // pred_check_branch
          %248 = sbr.rel (%p246) target = $region40
        $region39: #{tpu_custom_call.1} parent=31 // pred_region
          %249 = dma.done %s242, 128
        $region40: #{tpu_custom_call.1} parent=31 // pred_fallthru
          _
        %s250 = sand.u32 %s23, 1
        %s251 = scalar_lea.sflag [#allocation10], %s250
        %s252 = sand.u32 %s108, 1
        %s253 = smul.addr %s252, 8
        %s254 = scalar_lea.vmem [#allocation11], %s253
        // Predicated region
        $region41: #{tpu_custom_call.1} parent=31 // pred_check
          %p255 = pneg %p121
        $region42: #{tpu_custom_call.1} parent=31 // pred_check_branch
          %257 = sbr.rel (%p255) target = $region44
        $region43: #{tpu_custom_call.1} parent=31 // pred_region
          %258 = dma.done %s251, 128
        $region44: #{tpu_custom_call.1} parent=31 // pred_fallthru
          _
        %s259 = sand.u32 %s52, 1
        %s260 = scalar_lea.sflag [#allocation7], %s259
        %s261 = sand.u32 %s52, 1
        %s262 = smul.addr %s261, 8
        %s263 = scalar_lea.vmem [#allocation6], %s262
        %p264 = pneg %p65
        %p265 = pneg %p62
        %s266 = sand.u32 %s23, 1
        %s267 = scalar_lea.sflag [#allocation10], %s266
        %s268 = sand.u32 %s80, 1
        %s269 = smul.addr %s268, 8
        %s270 = scalar_lea.vmem [#allocation9], %s269
        %p271 = pneg %p93
        %p272 = pneg %p90
        %s273 = sand.u32 %s23, 1
        %s274 = scalar_lea.sflag [#allocation10], %s273
        %s275 = sand.u32 %s108, 1
        %s276 = smul.addr %s275, 8
        %s277 = scalar_lea.vmem [#allocation11], %s276
        %p278 = pneg %p121
        %p279 = pneg %p118
        %p280 = pneg %p149
        %p281 = pneg %p146
        %s282 = sand.u32 %s136, 1
        %s283 = scalar_lea.sflag [#allocation8], %s282
        %s284 = sand.u32 %s136, 1
        %s285 = smul.addr %s284, 8
        %s286 = scalar_lea.vmem [#allocation12], %s285
        %p287 = scmp.eq.s32.totalorder %s30, 0
        // Predicated region
        $region45: #{tpu_custom_call.1} parent=31 // pred_check
          %p288 = pneg %p287
        $region46: #{tpu_custom_call.1} parent=31 // pred_check_branch
          %290 = sbr.rel (%p288) target = $region48
        $region47: #{tpu_custom_call.1} parent=31 // pred_region
          %v291 = vld [vmem:[%s236] sm:$0xff]
          %v292 = vmul.f32 %v291, 0.35355338
          %vm293 = vcmask 64512
          %294 = vst.msk [vmem:[#allocation2] sm:$0xff] %vm293, %v292
          %v295 = vld [vmem:[%s236] sm:$0xff]
          %v296 = vmul.f32 %v295, 0.35355338
          %298 = vrot.lane.b32.xlu0 %v296, 120
          %v299 = vpop.permute.xlu0 %298
          %s301 = scalar_lea.vmem [#allocation2], 8
          %302 = vst.msk [vmem:[%s301] sm:$0xff] %vm293, %v299
          %v303 = vld [vmem:[%s236] sm:$0xff]
          %v304 = vmul.f32 %v303, 0.35355338
          %306 = vrot.lane.b32.xlu0 %v304, 112
          %v307 = vpop.permute.xlu0 %306
          %s309 = scalar_lea.vmem [#allocation2], 16
          %310 = vst.msk [vmem:[%s309] sm:$0xff] %vm293, %v307
          %v311 = vld [vmem:[%s236] sm:$0xff]
          %v312 = vmul.f32 %v311, 0.35355338
          %314 = vrot.lane.b32.xlu0 %v312, 104
          %v315 = vpop.permute.xlu0 %314
          %s317 = scalar_lea.vmem [#allocation2], 24
          %318 = vst.msk [vmem:[%s317] sm:$0xff] %vm293, %v315
          %319 = vst.msk [vmem:[#allocation3] sm:$0xff] %vm293, 0.0
          %320 = vst.msk [vmem:[#allocation3 + $0x8] sm:$0xff] %vm293, 0.0
          %321 = vst.msk [vmem:[#allocation3 + $0x10] sm:$0xff] %vm293, 0.0
          %322 = vst.msk [vmem:[#allocation3 + $0x18] sm:$0xff] %vm293, 0.0
          %vm323 = vcmask 7168
          %324 = vst.msk [vmem:[#allocation4] sm:$0xff] %vm323, -inf
          %325 = vst.msk [vmem:[#allocation4 + $0x8] sm:$0xff] %vm323, -inf
          %326 = vst.msk [vmem:[#allocation4 + $0x10] sm:$0xff] %vm323, -inf
          %327 = vst.msk [vmem:[#allocation4 + $0x18] sm:$0xff] %vm323, -inf
          %328 = vst.msk [vmem:[#allocation5] sm:$0xff] %vm323, 0.0
          %329 = vst.msk [vmem:[#allocation5 + $0x8] sm:$0xff] %vm323, 0.0
          %330 = vst.msk [vmem:[#allocation5 + $0x10] sm:$0xff] %vm323, 0.0
          %331 = vst.msk [vmem:[#allocation5 + $0x18] sm:$0xff] %vm323, 0.0
        $region48: #{tpu_custom_call.1} parent=31 // pred_fallthru
          _
        %v332 = vld [vmem:[#allocation2] sm:$0xff]
        %v333 = vld [vmem:[%s245] sm:$0xff]
        %v334 = vld [vmem:[%s254] sm:$0xff]
        %vm335 = vcmask 64512
        %v337 = vsel %vm335, %v332, 0
        %v340 = vsel %vm335, %v333, 0
        %342 = vmatprep.subr.mxu0 0.0
        %343 = vmatpush1.xpose.msra.mxu0 0.0
        %344 = vmatprep.subr.mxu0 0.0
        %345 = vmatpush1.xpose.msra.mxu0 0.0
        %346 = vmatprep.subr.mxu0 0.0
        %347 = vmatpush1.xpose.msra.mxu0 0.0
        %348 = vmatprep.subr.mxu0 0.0
        %349 = vmatpush1.xpose.msra.mxu0 0.0
        %350 = vmatprep.subr.mxu0 0.0
        %351 = vmatpush1.xpose.msra.mxu0 0.0
        %352 = vmatprep.subr.mxu0 0.0
        %353 = vmatpush1.xpose.msra.mxu0 0.0
        %354 = vmatprep.subr.mxu0 0.0
        %355 = vmatpush1.xpose.msra.mxu0 0.0
        %356 = vmatprep.subr.mxu0 0.0
        %357 = vmatpush1.xpose.msra.mxu0 0.0
        %358 = vmatprep.subr.mxu0 0.0
        %359 = vmatpush1.xpose.msra.mxu0 0.0
        %360 = vmatprep.subr.mxu0 0.0
        %361 = vmatpush1.xpose.msra.mxu0 0.0
        %362 = vmatprep.subr.mxu0 0.0
        %363 = vmatpush1.xpose.msra.mxu0 0.0
        %364 = vmatprep.subr.mxu0 0.0
        %365 = vmatpush1.xpose.msra.mxu0 0.0
        %366 = vmatprep.subr.mxu0 0.0
        %367 = vmatpush1.xpose.msra.mxu0 0.0
        %368 = vmatprep.subr.mxu0 0.0
        %369 = vmatpush1.xpose.msra.mxu0 0.0
        %370 = vmatprep.subr.mxu0 0.0
        %371 = vmatpush1.xpose.msra.mxu0 0.0
        %372 = vmatprep.subr.mxu0 0.0
        %373 = vmatpush1.xpose.msra.mxu0 %v340
        %374 = vmatprep.subr.mxu0 0.0
        %375 = vmatpush2.xpose.msra.mxu0 0.0
        %376 = vmatprep.subr.mxu0 0.0
        %377 = vmatpush2.xpose.msra.mxu0 0.0
        %378 = vmatprep.subr.mxu0 0.0
        %379 = vmatpush2.xpose.msra.mxu0 0.0
        %380 = vmatprep.subr.mxu0 0.0
        %381 = vmatpush2.xpose.msra.mxu0 0.0
        %382 = vmatprep.subr.mxu0 0.0
        %383 = vmatpush2.xpose.msra.mxu0 0.0
        %384 = vmatprep.subr.mxu0 0.0
        %385 = vmatpush2.xpose.msra.mxu0 0.0
        %386 = vmatprep.subr.mxu0 0.0
        %387 = vmatpush2.xpose.msra.mxu0 0.0
        %388 = vmatprep.subr.mxu0 0.0
        %389 = vmatpush2.xpose.msra.mxu0 0.0
        %390 = vmatprep.subr.mxu0 0.0
        %391 = vmatpush2.xpose.msra.mxu0 0.0
        %392 = vmatprep.subr.mxu0 0.0
        %393 = vmatpush2.xpose.msra.mxu0 0.0
        %394 = vmatprep.subr.mxu0 0.0
        %395 = vmatpush2.xpose.msra.mxu0 0.0
        %396 = vmatprep.subr.mxu0 0.0
        %397 = vmatpush2.xpose.msra.mxu0 0.0
        %398 = vmatprep.subr.mxu0 0.0
        %399 = vmatpush2.xpose.msra.mxu0 0.0
        %400 = vmatprep.subr.mxu0 0.0
        %401 = vmatpush2.xpose.msra.mxu0 0.0
        %402 = vmatprep.subr.mxu0 0.0
        %403 = vmatpush2.xpose.msra.mxu0 0.0
        %404 = vmatprep.subr.mxu0 0.0
        %405 = vmatpush2.xpose.msra.mxu0 0.0
        %406 = vmatprep.mubr.f32.mxu0 0.0
        %407 = vmatmul.mubr.f32.gmra.mxu0 %v337
        %v408 = vpop.f32.mrf.mxu0
        %v409 = vadd.f32 0.0, %v408
        %v410 = vpop.f32.mrf.mxu0
        %411 = vdwg.mxu0
        %v412 = vld [vmem:[#allocation4] sm:$0xff]
        %v413 = vld [vmem:[#allocation5] sm:$0xff]
        %v414 = vsel %vm335, %v409, -inf
        %415 = vmax.xlane.f32.xlu0 %v414
        %v416 = vpop.xlane.xlu0 %415
        %v417 = vmax.f32 %v412, %v416
        %v418 = vsub.f32 %v412, %v417
        %v419 = vmul.f32 %v418, 1.442695
        %v420 = vpow.pop %v419
        %422 = vset.pattern.permute.xlu0 0
        %423 = vperm.xlu0 %422, %v417
        %v424 = vpop.permute.xlu0 %423
        %v426 = vsub.f32 %v409, %v424
        %v427 = vmul.f32 %v426, 1.442695
        %v428 = vpow.pop %v427
        %v429 = vmul.f32 %v420, %v413
        %v430 = vsel %vm335, %v428, 0.0
        %431 = vadd.xlane.f32.xlu0 %v430
        %v432 = vpop.xlane.xlu0 %431
        %v433 = vadd.f32 %v429, %v432
        %vm434 = vcmask 7168
        %435 = vst.msk [vmem:[#allocation5] sm:$0xff] %vm434, %v433
        %436 = vst.msk [vmem:[#allocation4] sm:$0xff] %vm434, %v417
        %v438 = vsel %vm335, %v428, 0
        %440 = vmatprep.subr.mxu0 0.0
        %441 = vmatpush1.msra.mxu0 0.0
        %442 = vmatprep.subr.mxu0 0.0
        %443 = vmatpush1.msra.mxu0 0.0
        %444 = vmatprep.subr.mxu0 0.0
        %445 = vmatpush1.msra.mxu0 0.0
        %446 = vmatprep.subr.mxu0 0.0
        %447 = vmatpush1.msra.mxu0 0.0
        %448 = vmatprep.subr.mxu0 0.0
        %449 = vmatpush1.msra.mxu0 0.0
        %450 = vmatprep.subr.mxu0 0.0
        %451 = vmatpush1.msra.mxu0 0.0
        %452 = vmatprep.subr.mxu0 0.0
        %453 = vmatpush1.msra.mxu0 0.0
        %454 = vmatprep.subr.mxu0 0.0
        %455 = vmatpush1.msra.mxu0 0.0
        %456 = vmatprep.subr.mxu0 0.0
        %457 = vmatpush1.msra.mxu0 0.0
        %458 = vmatprep.subr.mxu0 0.0
        %459 = vmatpush1.msra.mxu0 0.0
        %460 = vmatprep.subr.mxu0 0.0
        %461 = vmatpush1.msra.mxu0 0.0
        %462 = vmatprep.subr.mxu0 0.0
        %463 = vmatpush1.msra.mxu0 0.0
        %464 = vmatprep.subr.mxu0 0.0
        %465 = vmatpush1.msra.mxu0 0.0
        %466 = vmatprep.subr.mxu0 0.0
        %467 = vmatpush1.msra.mxu0 0.0
        %468 = vmatprep.subr.mxu0 0.0
        %469 = vmatpush1.msra.mxu0 0.0
        %470 = vmatprep.subr.mxu0 0.0
        %471 = vmatpush1.msra.mxu0 %v334
        %472 = vmatprep.subr.mxu0 0.0
        %473 = vmatpush2.msra.mxu0 0.0
        %474 = vmatprep.subr.mxu0 0.0
        %475 = vmatpush2.msra.mxu0 0.0
        %476 = vmatprep.subr.mxu0 0.0
        %477 = vmatpush2.msra.mxu0 0.0
        %478 = vmatprep.subr.mxu0 0.0
        %479 = vmatpush2.msra.mxu0 0.0
        %480 = vmatprep.subr.mxu0 0.0
        %481 = vmatpush2.msra.mxu0 0.0
        %482 = vmatprep.subr.mxu0 0.0
        %483 = vmatpush2.msra.mxu0 0.0
        %484 = vmatprep.subr.mxu0 0.0
        %485 = vmatpush2.msra.mxu0 0.0
        %486 = vmatprep.subr.mxu0 0.0
        %487 = vmatpush2.msra.mxu0 0.0
        %488 = vmatprep.subr.mxu0 0.0
        %489 = vmatpush2.msra.mxu0 0.0
        %490 = vmatprep.subr.mxu0 0.0
        %491 = vmatpush2.msra.mxu0 0.0
        %492 = vmatprep.subr.mxu0 0.0
        %493 = vmatpush2.msra.mxu0 0.0
        %494 = vmatprep.subr.mxu0 0.0
        %495 = vmatpush2.msra.mxu0 0.0
        %496 = vmatprep.subr.mxu0 0.0
        %497 = vmatpush2.msra.mxu0 0.0
        %498 = vmatprep.subr.mxu0 0.0
        %499 = vmatpush2.msra.mxu0 0.0
        %500 = vmatprep.subr.mxu0 0.0
        %501 = vmatpush2.msra.mxu0 0.0
        %502 = vmatprep.subr.mxu0 0.0
        %503 = vmatpush2.msra.mxu0 0.0
        %504 = vmatprep.mubr.f32.mxu0 0.0
        %505 = vmatmul.mubr.f32.gmra.mxu0 %v438
        %v506 = vpop.f32.mrf.mxu0
        %v507 = vadd.f32 0.0, %v506
        %v508 = vpop.f32.mrf.mxu0
        %509 = vdwg.mxu0
        %v510 = vld [vmem:[#allocation3] sm:$0xff]
        %512 = vset.pattern.permute.xlu0 0
        %513 = vperm.xlu0 %512, %v420
        %v514 = vpop.permute.xlu0 %513
        %v516 = vmul.f32 %v514, %v510
        %v517 = vadd.f32 %v516, %v507
        %518 = vst.msk [vmem:[#allocation3] sm:$0xff] %vm335, %v517
        %s519 = scalar_lea.vmem [#allocation2], 8
        %v520 = vld [vmem:[%s519] sm:$0xff]
        %v521 = vld [vmem:[%s245] sm:$0xff]
        %v522 = vld [vmem:[%s254] sm:$0xff]
        %524 = vrot.lane.b32.xlu0 %v521, 120
        %v525 = vpop.permute.xlu0 %524
        %v527 = vsel %vm335, %v520, 0
        %v529 = vsel %vm335, %v525, 0
        %531 = vmatprep.subr.mxu0 0.0
        %532 = vmatpush1.xpose.msra.mxu0 0.0
        %533 = vmatprep.subr.mxu0 0.0
        %534 = vmatpush1.xpose.msra.mxu0 0.0
        %535 = vmatprep.subr.mxu0 0.0
        %536 = vmatpush1.xpose.msra.mxu0 0.0
        %537 = vmatprep.subr.mxu0 0.0
        %538 = vmatpush1.xpose.msra.mxu0 0.0
        %539 = vmatprep.subr.mxu0 0.0
        %540 = vmatpush1.xpose.msra.mxu0 0.0
        %541 = vmatprep.subr.mxu0 0.0
        %542 = vmatpush1.xpose.msra.mxu0 0.0
        %543 = vmatprep.subr.mxu0 0.0
        %544 = vmatpush1.xpose.msra.mxu0 0.0
        %545 = vmatprep.subr.mxu0 0.0
        %546 = vmatpush1.xpose.msra.mxu0 0.0
        %547 = vmatprep.subr.mxu0 0.0
        %548 = vmatpush1.xpose.msra.mxu0 0.0
        %549 = vmatprep.subr.mxu0 0.0
        %550 = vmatpush1.xpose.msra.mxu0 0.0
        %551 = vmatprep.subr.mxu0 0.0
        %552 = vmatpush1.xpose.msra.mxu0 0.0
        %553 = vmatprep.subr.mxu0 0.0
        %554 = vmatpush1.xpose.msra.mxu0 0.0
        %555 = vmatprep.subr.mxu0 0.0
        %556 = vmatpush1.xpose.msra.mxu0 0.0
        %557 = vmatprep.subr.mxu0 0.0
        %558 = vmatpush1.xpose.msra.mxu0 0.0
        %559 = vmatprep.subr.mxu0 0.0
        %560 = vmatpush1.xpose.msra.mxu0 0.0
        %561 = vmatprep.subr.mxu0 0.0
        %562 = vmatpush1.xpose.msra.mxu0 %v529
        %563 = vmatprep.subr.mxu0 0.0
        %564 = vmatpush2.xpose.msra.mxu0 0.0
        %565 = vmatprep.subr.mxu0 0.0
        %566 = vmatpush2.xpose.msra.mxu0 0.0
        %567 = vmatprep.subr.mxu0 0.0
        %568 = vmatpush2.xpose.msra.mxu0 0.0
        %569 = vmatprep.subr.mxu0 0.0
        %570 = vmatpush2.xpose.msra.mxu0 0.0
        %571 = vmatprep.subr.mxu0 0.0
        %572 = vmatpush2.xpose.msra.mxu0 0.0
        %573 = vmatprep.subr.mxu0 0.0
        %574 = vmatpush2.xpose.msra.mxu0 0.0
        %575 = vmatprep.subr.mxu0 0.0
        %576 = vmatpush2.xpose.msra.mxu0 0.0
        %577 = vmatprep.subr.mxu0 0.0
        %578 = vmatpush2.xpose.msra.mxu0 0.0
        %579 = vmatprep.subr.mxu0 0.0
        %580 = vmatpush2.xpose.msra.mxu0 0.0
        %581 = vmatprep.subr.mxu0 0.0
        %582 = vmatpush2.xpose.msra.mxu0 0.0
        %583 = vmatprep.subr.mxu0 0.0
        %584 = vmatpush2.xpose.msra.mxu0 0.0
        %585 = vmatprep.subr.mxu0 0.0
        %586 = vmatpush2.xpose.msra.mxu0 0.0
        %587 = vmatprep.subr.mxu0 0.0
        %588 = vmatpush2.xpose.msra.mxu0 0.0
        %589 = vmatprep.subr.mxu0 0.0
        %590 = vmatpush2.xpose.msra.mxu0 0.0
        %591 = vmatprep.subr.mxu0 0.0
        %592 = vmatpush2.xpose.msra.mxu0 0.0
        %593 = vmatprep.subr.mxu0 0.0
        %594 = vmatpush2.xpose.msra.mxu0 0.0
        %595 = vmatprep.mubr.f32.mxu0 0.0
        %596 = vmatmul.mubr.f32.gmra.mxu0 %v527
        %v597 = vpop.f32.mrf.mxu0
        %v598 = vadd.f32 0.0, %v597
        %v599 = vpop.f32.mrf.mxu0
        %600 = vdwg.mxu0
        %s601 = scalar_lea.vmem [#allocation4], 8
        %v602 = vld [vmem:[%s601] sm:$0xff]
        %s603 = scalar_lea.vmem [#allocation5], 8
        %v604 = vld [vmem:[%s603] sm:$0xff]
        %v605 = vsel %vm335, %v598, -inf
        %606 = vmax.xlane.f32.xlu0 %v605
        %v607 = vpop.xlane.xlu0 %606
        %v608 = vmax.f32 %v602, %v607
        %v609 = vsub.f32 %v602, %v608
        %v610 = vmul.f32 %v609, 1.442695
        %v611 = vpow.pop %v610
        %613 = vset.pattern.permute.xlu0 0
        %614 = vperm.xlu0 %613, %v608
        %v615 = vpop.permute.xlu0 %614
        %v617 = vsub.f32 %v598, %v615
        %v618 = vmul.f32 %v617, 1.442695
        %v619 = vpow.pop %v618
        %v620 = vmul.f32 %v611, %v604
        %v621 = vsel %vm335, %v619, 0.0
        %622 = vadd.xlane.f32.xlu0 %v621
        %v623 = vpop.xlane.xlu0 %622
        %v624 = vadd.f32 %v620, %v623
        %625 = vst.msk [vmem:[%s603] sm:$0xff] %vm434, %v624
        %626 = vst.msk [vmem:[%s601] sm:$0xff] %vm434, %v608
        %628 = vrot.lane.b32.xlu0 %v522, 120
        %v629 = vpop.permute.xlu0 %628
        %v632 = vsel %vm335, %v619, 0
        %634 = vmatprep.subr.mxu0 0.0
        %635 = vmatpush1.msra.mxu0 0.0
        %636 = vmatprep.subr.mxu0 0.0
        %637 = vmatpush1.msra.mxu0 0.0
        %638 = vmatprep.subr.mxu0 0.0
        %639 = vmatpush1.msra.mxu0 0.0
        %640 = vmatprep.subr.mxu0 0.0
        %641 = vmatpush1.msra.mxu0 0.0
        %642 = vmatprep.subr.mxu0 0.0
        %643 = vmatpush1.msra.mxu0 0.0
        %644 = vmatprep.subr.mxu0 0.0
        %645 = vmatpush1.msra.mxu0 0.0
        %646 = vmatprep.subr.mxu0 0.0
        %647 = vmatpush1.msra.mxu0 0.0
        %648 = vmatprep.subr.mxu0 0.0
        %649 = vmatpush1.msra.mxu0 0.0
        %650 = vmatprep.subr.mxu0 0.0
        %651 = vmatpush1.msra.mxu0 0.0
        %652 = vmatprep.subr.mxu0 0.0
        %653 = vmatpush1.msra.mxu0 0.0
        %654 = vmatprep.subr.mxu0 0.0
        %655 = vmatpush1.msra.mxu0 0.0
        %656 = vmatprep.subr.mxu0 0.0
        %657 = vmatpush1.msra.mxu0 0.0
        %658 = vmatprep.subr.mxu0 0.0
        %659 = vmatpush1.msra.mxu0 0.0
        %660 = vmatprep.subr.mxu0 0.0
        %661 = vmatpush1.msra.mxu0 0.0
        %662 = vmatprep.subr.mxu0 0.0
        %663 = vmatpush1.msra.mxu0 0.0
        %664 = vmatprep.subr.mxu0 0.0
        %665 = vmatpush1.msra.mxu0 %v629
        %666 = vmatprep.subr.mxu0 0.0
        %667 = vmatpush2.msra.mxu0 0.0
        %668 = vmatprep.subr.mxu0 0.0
        %669 = vmatpush2.msra.mxu0 0.0
        %670 = vmatprep.subr.mxu0 0.0
        %671 = vmatpush2.msra.mxu0 0.0
        %672 = vmatprep.subr.mxu0 0.0
        %673 = vmatpush2.msra.mxu0 0.0
        %674 = vmatprep.subr.mxu0 0.0
        %675 = vmatpush2.msra.mxu0 0.0
        %676 = vmatprep.subr.mxu0 0.0
        %677 = vmatpush2.msra.mxu0 0.0
        %678 = vmatprep.subr.mxu0 0.0
        %679 = vmatpush2.msra.mxu0 0.0
        %680 = vmatprep.subr.mxu0 0.0
        %681 = vmatpush2.msra.mxu0 0.0
        %682 = vmatprep.subr.mxu0 0.0
        %683 = vmatpush2.msra.mxu0 0.0
        %684 = vmatprep.subr.mxu0 0.0
        %685 = vmatpush2.msra.mxu0 0.0
        %686 = vmatprep.subr.mxu0 0.0
        %687 = vmatpush2.msra.mxu0 0.0
        %688 = vmatprep.subr.mxu0 0.0
        %689 = vmatpush2.msra.mxu0 0.0
        %690 = vmatprep.subr.mxu0 0.0
        %691 = vmatpush2.msra.mxu0 0.0
        %692 = vmatprep.subr.mxu0 0.0
        %693 = vmatpush2.msra.mxu0 0.0
        %694 = vmatprep.subr.mxu0 0.0
        %695 = vmatpush2.msra.mxu0 0.0
        %696 = vmatprep.subr.mxu0 0.0
        %697 = vmatpush2.msra.mxu0 0.0
        %698 = vmatprep.mubr.f32.mxu0 0.0
        %699 = vmatmul.mubr.f32.gmra.mxu0 %v632
        %v700 = vpop.f32.mrf.mxu0
        %v701 = vadd.f32 0.0, %v700
        %v702 = vpop.f32.mrf.mxu0
        %703 = vdwg.mxu0
        %s704 = scalar_lea.vmem [#allocation3], 8
        %v705 = vld [vmem:[%s704] sm:$0xff]
        %707 = vset.pattern.permute.xlu0 0
        %708 = vperm.xlu0 %707, %v611
        %v709 = vpop.permute.xlu0 %708
        %v711 = vmul.f32 %v709, %v705
        %v712 = vadd.f32 %v711, %v701
        %713 = vst.msk [vmem:[%s704] sm:$0xff] %vm335, %v712
        %s714 = scalar_lea.vmem [#allocation2], 16
        %v715 = vld [vmem:[%s714] sm:$0xff]
        %v716 = vld [vmem:[%s245] sm:$0xff]
        %v717 = vld [vmem:[%s254] sm:$0xff]
        %719 = vrot.lane.b32.xlu0 %v716, 112
        %v720 = vpop.permute.xlu0 %719
        %v722 = vsel %vm335, %v715, 0
        %v724 = vsel %vm335, %v720, 0
        %726 = vmatprep.subr.mxu0 0.0
        %727 = vmatpush1.xpose.msra.mxu0 0.0
        %728 = vmatprep.subr.mxu0 0.0
        %729 = vmatpush1.xpose.msra.mxu0 0.0
        %730 = vmatprep.subr.mxu0 0.0
        %731 = vmatpush1.xpose.msra.mxu0 0.0
        %732 = vmatprep.subr.mxu0 0.0
        %733 = vmatpush1.xpose.msra.mxu0 0.0
        %734 = vmatprep.subr.mxu0 0.0
        %735 = vmatpush1.xpose.msra.mxu0 0.0
        %736 = vmatprep.subr.mxu0 0.0
        %737 = vmatpush1.xpose.msra.mxu0 0.0
        %738 = vmatprep.subr.mxu0 0.0
        %739 = vmatpush1.xpose.msra.mxu0 0.0
        %740 = vmatprep.subr.mxu0 0.0
        %741 = vmatpush1.xpose.msra.mxu0 0.0
        %742 = vmatprep.subr.mxu0 0.0
        %743 = vmatpush1.xpose.msra.mxu0 0.0
        %744 = vmatprep.subr.mxu0 0.0
        %745 = vmatpush1.xpose.msra.mxu0 0.0
        %746 = vmatprep.subr.mxu0 0.0
        %747 = vmatpush1.xpose.msra.mxu0 0.0
        %748 = vmatprep.subr.mxu0 0.0
        %749 = vmatpush1.xpose.msra.mxu0 0.0
        %750 = vmatprep.subr.mxu0 0.0
        %751 = vmatpush1.xpose.msra.mxu0 0.0
        %752 = vmatprep.subr.mxu0 0.0
        %753 = vmatpush1.xpose.msra.mxu0 0.0
        %754 = vmatprep.subr.mxu0 0.0
        %755 = vmatpush1.xpose.msra.mxu0 0.0
        %756 = vmatprep.subr.mxu0 0.0
        %757 = vmatpush1.xpose.msra.mxu0 %v724
        %758 = vmatprep.subr.mxu0 0.0
        %759 = vmatpush2.xpose.msra.mxu0 0.0
        %760 = vmatprep.subr.mxu0 0.0
        %761 = vmatpush2.xpose.msra.mxu0 0.0
        %762 = vmatprep.subr.mxu0 0.0
        %763 = vmatpush2.xpose.msra.mxu0 0.0
        %764 = vmatprep.subr.mxu0 0.0
        %765 = vmatpush2.xpose.msra.mxu0 0.0
        %766 = vmatprep.subr.mxu0 0.0
        %767 = vmatpush2.xpose.msra.mxu0 0.0
        %768 = vmatprep.subr.mxu0 0.0
        %769 = vmatpush2.xpose.msra.mxu0 0.0
        %770 = vmatprep.subr.mxu0 0.0
        %771 = vmatpush2.xpose.msra.mxu0 0.0
        %772 = vmatprep.subr.mxu0 0.0
        %773 = vmatpush2.xpose.msra.mxu0 0.0
        %774 = vmatprep.subr.mxu0 0.0
        %775 = vmatpush2.xpose.msra.mxu0 0.0
        %776 = vmatprep.subr.mxu0 0.0
        %777 = vmatpush2.xpose.msra.mxu0 0.0
        %778 = vmatprep.subr.mxu0 0.0
        %779 = vmatpush2.xpose.msra.mxu0 0.0
        %780 = vmatprep.subr.mxu0 0.0
        %781 = vmatpush2.xpose.msra.mxu0 0.0
        %782 = vmatprep.subr.mxu0 0.0
        %783 = vmatpush2.xpose.msra.mxu0 0.0
        %784 = vmatprep.subr.mxu0 0.0
        %785 = vmatpush2.xpose.msra.mxu0 0.0
        %786 = vmatprep.subr.mxu0 0.0
        %787 = vmatpush2.xpose.msra.mxu0 0.0
        %788 = vmatprep.subr.mxu0 0.0
        %789 = vmatpush2.xpose.msra.mxu0 0.0
        %790 = vmatprep.mubr.f32.mxu0 0.0
        %791 = vmatmul.mubr.f32.gmra.mxu0 %v722
        %v792 = vpop.f32.mrf.mxu0
        %v793 = vadd.f32 0.0, %v792
        %v794 = vpop.f32.mrf.mxu0
        %795 = vdwg.mxu0
        %s796 = scalar_lea.vmem [#allocation4], 16
        %v797 = vld [vmem:[%s796] sm:$0xff]
        %s798 = scalar_lea.vmem [#allocation5], 16
        %v799 = vld [vmem:[%s798] sm:$0xff]
        %v800 = vsel %vm335, %v793, -inf
        %801 = vmax.xlane.f32.xlu0 %v800
        %v802 = vpop.xlane.xlu0 %801
        %v803 = vmax.f32 %v797, %v802
        %v804 = vsub.f32 %v797, %v803
        %v805 = vmul.f32 %v804, 1.442695
        %v806 = vpow.pop %v805
        %808 = vset.pattern.permute.xlu0 0
        %809 = vperm.xlu0 %808, %v803
        %v810 = vpop.permute.xlu0 %809
        %v812 = vsub.f32 %v793, %v810
        %v813 = vmul.f32 %v812, 1.442695
        %v814 = vpow.pop %v813
        %v815 = vmul.f32 %v806, %v799
        %v816 = vsel %vm335, %v814, 0.0
        %817 = vadd.xlane.f32.xlu0 %v816
        %v818 = vpop.xlane.xlu0 %817
        %v819 = vadd.f32 %v815, %v818
        %820 = vst.msk [vmem:[%s798] sm:$0xff] %vm434, %v819
        %821 = vst.msk [vmem:[%s796] sm:$0xff] %vm434, %v803
        %823 = vrot.lane.b32.xlu0 %v717, 112
        %v824 = vpop.permute.xlu0 %823
        %v827 = vsel %vm335, %v814, 0
        %829 = vmatprep.subr.mxu0 0.0
        %830 = vmatpush1.msra.mxu0 0.0
        %831 = vmatprep.subr.mxu0 0.0
        %832 = vmatpush1.msra.mxu0 0.0
        %833 = vmatprep.subr.mxu0 0.0
        %834 = vmatpush1.msra.mxu0 0.0
        %835 = vmatprep.subr.mxu0 0.0
        %836 = vmatpush1.msra.mxu0 0.0
        %837 = vmatprep.subr.mxu0 0.0
        %838 = vmatpush1.msra.mxu0 0.0
        %839 = vmatprep.subr.mxu0 0.0
        %840 = vmatpush1.msra.mxu0 0.0
        %841 = vmatprep.subr.mxu0 0.0
        %842 = vmatpush1.msra.mxu0 0.0
        %843 = vmatprep.subr.mxu0 0.0
        %844 = vmatpush1.msra.mxu0 0.0
        %845 = vmatprep.subr.mxu0 0.0
        %846 = vmatpush1.msra.mxu0 0.0
        %847 = vmatprep.subr.mxu0 0.0
        %848 = vmatpush1.msra.mxu0 0.0
        %849 = vmatprep.subr.mxu0 0.0
        %850 = vmatpush1.msra.mxu0 0.0
        %851 = vmatprep.subr.mxu0 0.0
        %852 = vmatpush1.msra.mxu0 0.0
        %853 = vmatprep.subr.mxu0 0.0
        %854 = vmatpush1.msra.mxu0 0.0
        %855 = vmatprep.subr.mxu0 0.0
        %856 = vmatpush1.msra.mxu0 0.0
        %857 = vmatprep.subr.mxu0 0.0
        %858 = vmatpush1.msra.mxu0 0.0
        %859 = vmatprep.subr.mxu0 0.0
        %860 = vmatpush1.msra.mxu0 %v824
        %861 = vmatprep.subr.mxu0 0.0
        %862 = vmatpush2.msra.mxu0 0.0
        %863 = vmatprep.subr.mxu0 0.0
        %864 = vmatpush2.msra.mxu0 0.0
        %865 = vmatprep.subr.mxu0 0.0
        %866 = vmatpush2.msra.mxu0 0.0
        %867 = vmatprep.subr.mxu0 0.0
        %868 = vmatpush2.msra.mxu0 0.0
        %869 = vmatprep.subr.mxu0 0.0
        %870 = vmatpush2.msra.mxu0 0.0
        %871 = vmatprep.subr.mxu0 0.0
        %872 = vmatpush2.msra.mxu0 0.0
        %873 = vmatprep.subr.mxu0 0.0
        %874 = vmatpush2.msra.mxu0 0.0
        %875 = vmatprep.subr.mxu0 0.0
        %876 = vmatpush2.msra.mxu0 0.0
        %877 = vmatprep.subr.mxu0 0.0
        %878 = vmatpush2.msra.mxu0 0.0
        %879 = vmatprep.subr.mxu0 0.0
        %880 = vmatpush2.msra.mxu0 0.0
        %881 = vmatprep.subr.mxu0 0.0
        %882 = vmatpush2.msra.mxu0 0.0
        %883 = vmatprep.subr.mxu0 0.0
        %884 = vmatpush2.msra.mxu0 0.0
        %885 = vmatprep.subr.mxu0 0.0
        %886 = vmatpush2.msra.mxu0 0.0
        %887 = vmatprep.subr.mxu0 0.0
        %888 = vmatpush2.msra.mxu0 0.0
        %889 = vmatprep.subr.mxu0 0.0
        %890 = vmatpush2.msra.mxu0 0.0
        %891 = vmatprep.subr.mxu0 0.0
        %892 = vmatpush2.msra.mxu0 0.0
        %893 = vmatprep.mubr.f32.mxu0 0.0
        %894 = vmatmul.mubr.f32.gmra.mxu0 %v827
        %v895 = vpop.f32.mrf.mxu0
        %v896 = vadd.f32 0.0, %v895
        %v897 = vpop.f32.mrf.mxu0
        %898 = vdwg.mxu0
        %s899 = scalar_lea.vmem [#allocation3], 16
        %v900 = vld [vmem:[%s899] sm:$0xff]
        %902 = vset.pattern.permute.xlu0 0
        %903 = vperm.xlu0 %902, %v806
        %v904 = vpop.permute.xlu0 %903
        %v906 = vmul.f32 %v904, %v900
        %v907 = vadd.f32 %v906, %v896
        %908 = vst.msk [vmem:[%s899] sm:$0xff] %vm335, %v907
        %s909 = scalar_lea.vmem [#allocation2], 24
        %v910 = vld [vmem:[%s909] sm:$0xff]
        %v911 = vld [vmem:[%s245] sm:$0xff]
        %v912 = vld [vmem:[%s254] sm:$0xff]
        %914 = vrot.lane.b32.xlu0 %v911, 104
        %v915 = vpop.permute.xlu0 %914
        %v917 = vsel %vm335, %v910, 0
        %v919 = vsel %vm335, %v915, 0
        %921 = vmatprep.subr.mxu0 0.0
        %922 = vmatpush1.xpose.msra.mxu0 0.0
        %923 = vmatprep.subr.mxu0 0.0
        %924 = vmatpush1.xpose.msra.mxu0 0.0
        %925 = vmatprep.subr.mxu0 0.0
        %926 = vmatpush1.xpose.msra.mxu0 0.0
        %927 = vmatprep.subr.mxu0 0.0
        %928 = vmatpush1.xpose.msra.mxu0 0.0
        %929 = vmatprep.subr.mxu0 0.0
        %930 = vmatpush1.xpose.msra.mxu0 0.0
        %931 = vmatprep.subr.mxu0 0.0
        %932 = vmatpush1.xpose.msra.mxu0 0.0
        %933 = vmatprep.subr.mxu0 0.0
        %934 = vmatpush1.xpose.msra.mxu0 0.0
        %935 = vmatprep.subr.mxu0 0.0
        %936 = vmatpush1.xpose.msra.mxu0 0.0
        %937 = vmatprep.subr.mxu0 0.0
        %938 = vmatpush1.xpose.msra.mxu0 0.0
        %939 = vmatprep.subr.mxu0 0.0
        %940 = vmatpush1.xpose.msra.mxu0 0.0
        %941 = vmatprep.subr.mxu0 0.0
        %942 = vmatpush1.xpose.msra.mxu0 0.0
        %943 = vmatprep.subr.mxu0 0.0
        %944 = vmatpush1.xpose.msra.mxu0 0.0
        %945 = vmatprep.subr.mxu0 0.0
        %946 = vmatpush1.xpose.msra.mxu0 0.0
        %947 = vmatprep.subr.mxu0 0.0
        %948 = vmatpush1.xpose.msra.mxu0 0.0
        %949 = vmatprep.subr.mxu0 0.0
        %950 = vmatpush1.xpose.msra.mxu0 0.0
        %951 = vmatprep.subr.mxu0 0.0
        %952 = vmatpush1.xpose.msra.mxu0 %v919
        %953 = vmatprep.subr.mxu0 0.0
        %954 = vmatpush2.xpose.msra.mxu0 0.0
        %955 = vmatprep.subr.mxu0 0.0
        %956 = vmatpush2.xpose.msra.mxu0 0.0
        %957 = vmatprep.subr.mxu0 0.0
        %958 = vmatpush2.xpose.msra.mxu0 0.0
        %959 = vmatprep.subr.mxu0 0.0
        %960 = vmatpush2.xpose.msra.mxu0 0.0
        %961 = vmatprep.subr.mxu0 0.0
        %962 = vmatpush2.xpose.msra.mxu0 0.0
        %963 = vmatprep.subr.mxu0 0.0
        %964 = vmatpush2.xpose.msra.mxu0 0.0
        %965 = vmatprep.subr.mxu0 0.0
        %966 = vmatpush2.xpose.msra.mxu0 0.0
        %967 = vmatprep.subr.mxu0 0.0
        %968 = vmatpush2.xpose.msra.mxu0 0.0
        %969 = vmatprep.subr.mxu0 0.0
        %970 = vmatpush2.xpose.msra.mxu0 0.0
        %971 = vmatprep.subr.mxu0 0.0
        %972 = vmatpush2.xpose.msra.mxu0 0.0
        %973 = vmatprep.subr.mxu0 0.0
        %974 = vmatpush2.xpose.msra.mxu0 0.0
        %975 = vmatprep.subr.mxu0 0.0
        %976 = vmatpush2.xpose.msra.mxu0 0.0
        %977 = vmatprep.subr.mxu0 0.0
        %978 = vmatpush2.xpose.msra.mxu0 0.0
        %979 = vmatprep.subr.mxu0 0.0
        %980 = vmatpush2.xpose.msra.mxu0 0.0
        %981 = vmatprep.subr.mxu0 0.0
        %982 = vmatpush2.xpose.msra.mxu0 0.0
        %983 = vmatprep.subr.mxu0 0.0
        %984 = vmatpush2.xpose.msra.mxu0 0.0
        %985 = vmatprep.mubr.f32.mxu0 0.0
        %986 = vmatmul.mubr.f32.gmra.mxu0 %v917
        %v987 = vpop.f32.mrf.mxu0
        %v988 = vadd.f32 0.0, %v987
        %v989 = vpop.f32.mrf.mxu0
        %990 = vdwg.mxu0
        %s991 = scalar_lea.vmem [#allocation4], 24
        %v992 = vld [vmem:[%s991] sm:$0xff]
        %s993 = scalar_lea.vmem [#allocation5], 24
        %v994 = vld [vmem:[%s993] sm:$0xff]
        %v995 = vsel %vm335, %v988, -inf
        %996 = vmax.xlane.f32.xlu0 %v995
        %v997 = vpop.xlane.xlu0 %996
        %v998 = vmax.f32 %v992, %v997
        %v999 = vsub.f32 %v992, %v998
        %v1000 = vmul.f32 %v999, 1.442695
        %v1001 = vpow.pop %v1000
        %1003 = vset.pattern.permute.xlu0 0
        %1004 = vperm.xlu0 %1003, %v998
        %v1005 = vpop.permute.xlu0 %1004
        %v1007 = vsub.f32 %v988, %v1005
        %v1008 = vmul.f32 %v1007, 1.442695
        %v1009 = vpow.pop %v1008
        %v1010 = vmul.f32 %v1001, %v994
        %v1011 = vsel %vm335, %v1009, 0.0
        %1012 = vadd.xlane.f32.xlu0 %v1011
        %v1013 = vpop.xlane.xlu0 %1012
        %v1014 = vadd.f32 %v1010, %v1013
        %1015 = vst.msk [vmem:[%s993] sm:$0xff] %vm434, %v1014
        %1016 = vst.msk [vmem:[%s991] sm:$0xff] %vm434, %v998
        %1018 = vrot.lane.b32.xlu0 %v912, 104
        %v1019 = vpop.permute.xlu0 %1018
        %v1022 = vsel %vm335, %v1009, 0
        %1024 = vmatprep.subr.mxu0 0.0
        %1025 = vmatpush1.msra.mxu0 0.0
        %1026 = vmatprep.subr.mxu0 0.0
        %1027 = vmatpush1.msra.mxu0 0.0
        %1028 = vmatprep.subr.mxu0 0.0
        %1029 = vmatpush1.msra.mxu0 0.0
        %1030 = vmatprep.subr.mxu0 0.0
        %1031 = vmatpush1.msra.mxu0 0.0
        %1032 = vmatprep.subr.mxu0 0.0
        %1033 = vmatpush1.msra.mxu0 0.0
        %1034 = vmatprep.subr.mxu0 0.0
        %1035 = vmatpush1.msra.mxu0 0.0
        %1036 = vmatprep.subr.mxu0 0.0
        %1037 = vmatpush1.msra.mxu0 0.0
        %1038 = vmatprep.subr.mxu0 0.0
        %1039 = vmatpush1.msra.mxu0 0.0
        %1040 = vmatprep.subr.mxu0 0.0
        %1041 = vmatpush1.msra.mxu0 0.0
        %1042 = vmatprep.subr.mxu0 0.0
        %1043 = vmatpush1.msra.mxu0 0.0
        %1044 = vmatprep.subr.mxu0 0.0
        %1045 = vmatpush1.msra.mxu0 0.0
        %1046 = vmatprep.subr.mxu0 0.0
        %1047 = vmatpush1.msra.mxu0 0.0
        %1048 = vmatprep.subr.mxu0 0.0
        %1049 = vmatpush1.msra.mxu0 0.0
        %1050 = vmatprep.subr.mxu0 0.0
        %1051 = vmatpush1.msra.mxu0 0.0
        %1052 = vmatprep.subr.mxu0 0.0
        %1053 = vmatpush1.msra.mxu0 0.0
        %1054 = vmatprep.subr.mxu0 0.0
        %1055 = vmatpush1.msra.mxu0 %v1019
        %1056 = vmatprep.subr.mxu0 0.0
        %1057 = vmatpush2.msra.mxu0 0.0
        %1058 = vmatprep.subr.mxu0 0.0
        %1059 = vmatpush2.msra.mxu0 0.0
        %1060 = vmatprep.subr.mxu0 0.0
        %1061 = vmatpush2.msra.mxu0 0.0
        %1062 = vmatprep.subr.mxu0 0.0
        %1063 = vmatpush2.msra.mxu0 0.0
        %1064 = vmatprep.subr.mxu0 0.0
        %1065 = vmatpush2.msra.mxu0 0.0
        %1066 = vmatprep.subr.mxu0 0.0
        %1067 = vmatpush2.msra.mxu0 0.0
        %1068 = vmatprep.subr.mxu0 0.0
        %1069 = vmatpush2.msra.mxu0 0.0
        %1070 = vmatprep.subr.mxu0 0.0
        %1071 = vmatpush2.msra.mxu0 0.0
        %1072 = vmatprep.subr.mxu0 0.0
        %1073 = vmatpush2.msra.mxu0 0.0
        %1074 = vmatprep.subr.mxu0 0.0
        %1075 = vmatpush2.msra.mxu0 0.0
        %1076 = vmatprep.subr.mxu0 0.0
        %1077 = vmatpush2.msra.mxu0 0.0
        %1078 = vmatprep.subr.mxu0 0.0
        %1079 = vmatpush2.msra.mxu0 0.0
        %1080 = vmatprep.subr.mxu0 0.0
        %1081 = vmatpush2.msra.mxu0 0.0
        %1082 = vmatprep.subr.mxu0 0.0
        %1083 = vmatpush2.msra.mxu0 0.0
        %1084 = vmatprep.subr.mxu0 0.0
        %1085 = vmatpush2.msra.mxu0 0.0
        %1086 = vmatprep.subr.mxu0 0.0
        %1087 = vmatpush2.msra.mxu0 0.0
        %1088 = vmatprep.mubr.f32.mxu0 0.0
        %1089 = vmatmul.mubr.f32.gmra.mxu0 %v1022
        %v1090 = vpop.f32.mrf.mxu0
        %v1091 = vadd.f32 0.0, %v1090
        %v1092 = vpop.f32.mrf.mxu0
        %1093 = vdwg.mxu0
        %s1094 = scalar_lea.vmem [#allocation3], 24
        %v1095 = vld [vmem:[%s1094] sm:$0xff]
        %1097 = vset.pattern.permute.xlu0 0
        %1098 = vperm.xlu0 %1097, %v1001
        %v1099 = vpop.permute.xlu0 %1098
        %v1101 = vmul.f32 %v1099, %v1095
        %v1102 = vadd.f32 %v1101, %v1091
        %1103 = vst.msk [vmem:[%s1094] sm:$0xff] %vm335, %v1102
        // Predicated region
        $region49: #{tpu_custom_call.1} parent=31 // pred_check
          %p1104 = pneg %p287
        $region50: #{tpu_custom_call.1} parent=31 // pred_check_branch
          %1106 = sbr.rel (%p1104) target = $region52
        $region51: #{tpu_custom_call.1} parent=31 // pred_region
          %v1107 = vld [vmem:[#allocation3] sm:$0xff]
          %v1108 = vld [vmem:[#allocation5] sm:$0xff]
          %1110 = vset.pattern.permute.xlu0 0
          %1111 = vperm.xlu0 %1110, %v1108
          %v1112 = vpop.permute.xlu0 %1111
          %v1114 = vrcp.pop %v1112
          %v1115 = vmul.f32 %v1107, %v1114
          %v1116 = vld [vmem:[%s704] sm:$0xff]
          %v1117 = vld [vmem:[%s603] sm:$0xff]
          %1119 = vset.pattern.permute.xlu0 0
          %1120 = vperm.xlu0 %1119, %v1117
          %v1121 = vpop.permute.xlu0 %1120
          %v1123 = vrcp.pop %v1121
          %v1124 = vmul.f32 %v1116, %v1123
          %v1125 = vld [vmem:[%s899] sm:$0xff]
          %v1126 = vld [vmem:[%s798] sm:$0xff]
          %1128 = vset.pattern.permute.xlu0 0
          %1129 = vperm.xlu0 %1128, %v1126
          %v1130 = vpop.permute.xlu0 %1129
          %v1132 = vrcp.pop %v1130
          %v1133 = vmul.f32 %v1125, %v1132
          %v1134 = vld [vmem:[%s1094] sm:$0xff]
          %v1135 = vld [vmem:[%s993] sm:$0xff]
          %1137 = vset.pattern.permute.xlu0 0
          %1138 = vperm.xlu0 %1137, %v1135
          %v1139 = vpop.permute.xlu0 %1138
          %v1141 = vrcp.pop %v1139
          %v1142 = vmul.f32 %v1134, %v1141
          %1144 = vrot.lane.b32.xlu0 %v1124, 8
          %v1145 = vpop.permute.xlu0 %1144
          %1148 = vrot.lane.b32.xlu0 %v1133, 16
          %v1149 = vpop.permute.xlu0 %1148
          %1152 = vrot.lane.b32.xlu0 %v1142, 24
          %v1153 = vpop.permute.xlu0 %1152
          %v1155 = vsel %vm335, %v1115, %v1145
          %vm1156 = vcmask 130048
          %v1157 = vsel %vm1156, %v1155, %v1149
          %vm1158 = vcmask 195584
          %v1159 = vsel %vm1158, %v1157, %v1153
          %vm1160 = vcmask 261120
          %1161 = vst.msk [vmem:[%s286] sm:$0xff] %vm1160, %v1159
        $region52: #{tpu_custom_call.1} parent=31 // pred_fallthru
          _
        %s1162 = sand.u32 %s136, 1
        %s1163 = scalar_lea.sflag [#allocation8], %s1162
        %s1164 = sand.u32 %s136, 1
        %s1165 = smul.addr %s1164, 8
        %s1166 = scalar_lea.vmem [#allocation12], %s1165
        // Predicated region
        $region53: #{tpu_custom_call.1} parent=31 // pred_check
          %p1167 = pneg %p146
        $region54: #{tpu_custom_call.1} parent=31 // pred_check_branch
          %1169 = sbr.rel (%p1167) target = $region56
        $region55: #{tpu_custom_call.1} parent=31 // pred_region
          %s1171 = ssub.s32 128, 128
          %1172 = vsyncadd %s1163, %s1171
          %s1173 = sadd.s32 %s29, %s28
          %s1174 = smul.addr %s1173, 128
          %s1175 = scalar_lea.hbm %s3, %s1174
          %s1177 = sshll.u32 %s1166, 4
          %s1178 = int_to_ptr.vmem [resolvable:$true] %s1177
          %1180 = dma.vmem_to_hbm [thread:$0]  %s1178, 128, %s1175, %s1163
        $region56: #{tpu_custom_call.1} parent=31 // pred_fallthru
          _
      $region32: #{tpu_custom_call.1} parent=5 // pred_fallthru
        _
      %p1181 = scmp.le.s32.totalorder 2, %s18
      // Predicated region
      $region57: #{tpu_custom_call.1} parent=5 // pred_check
        %p1182 = pneg %p1181
      $region58: #{tpu_custom_call.1} parent=5 // pred_check_branch
        %1184 = sbr.rel (%p1182) target = $region60
      $region59: #{tpu_custom_call.1} parent=5 // pred_region
        %s1185 = ssub.s32 %s18, 2
        // Predicated region
        $region61: #{tpu_custom_call.1} parent=59 // pred_check
          %p1186 = pneg %p152
        $region62: #{tpu_custom_call.1} parent=59 // pred_check_branch
          %1188 = sbr.rel (%p1186) target = $region64
        $region63: #{tpu_custom_call.1} parent=59 // pred_region
          %s1189 = sand.u32 %s137, 1
          %s1190 = scalar_lea.sflag [#allocation8], %s1189
          %s1191 = sand.u32 %s137, 1
          %s1192 = smul.addr %s1191, 8
          %s1193 = scalar_lea.vmem [#allocation12], %s1192
          %1194 = dma.done %s1190, 128
        $region64: #{tpu_custom_call.1} parent=59 // pred_fallthru
          _
      $region60: #{tpu_custom_call.1} parent=5 // pred_fallthru
        _
    $region6: #{tpu_custom_call.1} parent=1 // loop_footer
      %s22 = sadd.s32 1, %s18
    $region7: #{tpu_custom_call.1} parent=1 // loop_footer_branch
      %17 = sbr.rel target = $region3
    $region8: #{tpu_custom_call.1} parent=1 // loop_exit
      _
    %1195 = vsyncpa [#allocation7], 1
    %s1196 = scalar_lea.sflag [#allocation7], 1
    %1197 = vsyncpa %s1196, 1
    %1198 = vsyncpa [#allocation10], 1
    %s1199 = scalar_lea.sflag [#allocation10], 1
    %1200 = vsyncpa %s1199, 1
    %1201 = vsyncpa [#allocation8], 1
    %s1202 = scalar_lea.sflag [#allocation8], 1
    %1203 = vsyncpa %s1202, 1

</llo_original>
